<compile_context>
chip_gen: v7x
topology: tpu7x:2x2x1
jax: 0.10.0
libtpu: 0.0.40
codegen_flags: <defaults>
</compile_context>

<pallas_src>
import jax
import jax.numpy as jnp
from jax.experimental import pallas as pl
from jax.experimental.pallas import tpu as pltpu

# ----------------------- small synthetic DINOv2-like config -----------------------
B = 2
C = 3
IMG = 16
PATCH = 8
NP_SIDE = IMG // PATCH
N_PATCH = NP_SIDE * NP_SIDE                     # 4
PDIM = C * PATCH * PATCH                        # 192
PDIM_PAD = ((PDIM + 127) // 128) * 128          # 256 (full MXU K-tiles)
D = 32                                          # hidden size == vis_emb_dim
HEADS = 2
HDIM = D // HEADS                               # 16
MLP = 4 * D                                     # 128
S = N_PATCH + 1                                 # CLS + patches = 5
ROWS = B * S                                    # batch folded into rows = 10
LAYERS = 2
EPS = 1e-6
SCALE = 1.0 / (HDIM ** 0.5)
NEG_INF = -1e9

VW = max(MLP, 3 * D)                            # packed per-layer vector width = 128
NVEC = 10                                       # ln1(g,b), bqkv, bo, ls1, ln2(g,b), b1, b2, ls2
OUT_W = max(D, 128)                             # lane-dense padded output width
OUT_ROWS = ((B + 7) // 8) * 8                   # sublane-dense padded output rows
MXU_DTYPE = jnp.bfloat16                        # MXU operand dtype (f32 accumulate)


# ----------------------------- in-kernel math helpers -------------------------------
def _erf(z):
    # Abramowitz & Stegun 7.1.26 rational erf approximation (|abs err| < 1.5e-7),
    # i.e. exact-GELU semantics to within f32 noise, built only from ops that are
    # guaranteed to lower in Mosaic (abs/exp/div/where).  The exp goes to the EUP.
    a1, a2, a3, a4, a5 = (0.254829592, -0.284496736, 1.421413741,
                          -1.453152027, 1.061405429)
    t = 1.0 / (1.0 + 0.3275911 * jnp.abs(z))
    poly = ((((a5 * t + a4) * t + a3) * t + a2) * t + a1) * t
    e = 1.0 - poly * jnp.exp(-(z * z))
    return jnp.where(z >= 0.0, e, -e)


def _gelu_exact(x):
    # erf-based ("exact") GELU as used by HF Dinov2 (not the tanh approximation).
    return 0.5 * x * (1.0 + _erf(x * 0.7071067811865476))


def _layernorm(v, g, b):
    mu = jnp.mean(v, axis=-1, keepdims=True)
    var = jnp.mean(jnp.square(v - mu), axis=-1, keepdims=True)
    return (v - mu) * jax.lax.rsqrt(var + EPS) * g + b


# --------------------------------- fused kernel -------------------------------------
def _encoder_kernel(patches_ref, mask_ref, sel_ref, pw_ref, tokbias_ref,
                    wqkv_ref, wout_ref, wmlp1_ref, wmlp2_ref, vec_ref, fln_ref,
                    o_ref):
    # Whole batch in one step: activations are a single (ROWS = B*S, .) matrix.
    # Patch embed: CLS slots are zero rows, so x = patches @ W' + tokbias, where
    # W' has the processor 1/std folded in and tokbias carries CLS+pos (CLS rows)
    # and pos + folded patch bias (patch rows), pre-tiled over the batch.
    x = jnp.dot(patches_ref[...].astype(MXU_DTYPE), pw_ref[...],
                preferred_element_type=jnp.float32) + tokbias_ref[...]   # (ROWS, D)

    attn_mask = mask_ref[...]            # (ROWS, ROWS) block-diag 0 / -1e9 f32

    for l in range(LAYERS):              # static unroll; all layer weights resident
        vec = vec_ref[l]                 # (NVEC, VW) f32 slab of per-layer vectors
        ln1g, ln1b = vec[0:1, :D], vec[1:2, :D]
        bqkv = vec[2:3, :3 * D]
        bo, ls1 = vec[3:4, :D], vec[4:5, :D]
        ln2g, ln2b = vec[5:6, :D], vec[6:7, :D]
        b1 = vec[7:8, :MLP]
        b2, ls2 = vec[8:9, :D], vec[9:10, :D]

        # ---- self-attention: one fused QKV matmul over all batch rows ----
        h1 = _layernorm(x, ln1g, ln1b)                                   # (ROWS, D)
        qkv = jnp.dot(h1.astype(MXU_DTYPE), wqkv_ref[l],
                      preferred_element_type=jnp.float32) + bqkv         # (ROWS, 3D)

        # heads appear only in the small score/context matmuls (lane slices of qkv);
        # the block-diagonal mask keeps attention strictly per-image.
        ctx_parts = []
        for h in range(HEADS):
            qh = qkv[:, h * HDIM:(h + 1) * HDIM].astype(MXU_DTYPE)
            kh = qkv[:, D + h * HDIM:D + (h + 1) * HDIM].astype(MXU_DTYPE)
            vh = qkv[:, 2 * D + h * HDIM:2 * D + (h + 1) * HDIM].astype(MXU_DTYPE)
            s = jnp.einsum("qe,ke->qk", qh, kh,
                           preferred_element_type=jnp.float32) * SCALE + attn_mask
            s = s - jnp.max(s, axis=-1, keepdims=True)
            p = jnp.exp(s)
            p = p * pl.reciprocal(jnp.sum(p, axis=-1, keepdims=True), approx=True)
            ctx_parts.append(
                jnp.einsum("qk,ke->qe", p.astype(MXU_DTYPE), vh,
                           preferred_element_type=jnp.float32))           # (ROWS, E)
        ctx = jnp.concatenate(ctx_parts, axis=-1)                         # (ROWS, D)

        # single output projection matmul (reduction over heads stays on the MXU)
        attn = jnp.dot(ctx.astype(MXU_DTYPE), wout_ref[l],
                       preferred_element_type=jnp.float32) + bo
        x = x + ls1 * attn                                                # layerscale 1

        # ---- MLP ----
        h2 = _layernorm(x, ln2g, ln2b)
        m = jnp.dot(h2.astype(MXU_DTYPE), wmlp1_ref[l],
                    preferred_element_type=jnp.float32) + b1
        m = _gelu_exact(m)
        m = jnp.dot(m.astype(MXU_DTYPE), wmlp2_ref[l],
                    preferred_element_type=jnp.float32) + b2
        x = x + ls2 * m                                                   # layerscale 2

    # CLS gather with a constant 0/1 selection matmul (rows >= B are zero padding
    # rows), final LayerNorm, then a sublane+lane dense (OUT_ROWS, OUT_W) store.
    cls = jnp.dot(sel_ref[...], x, preferred_element_type=jnp.float32)    # (OUT_ROWS, D)
    y = _layernorm(cls, fln_ref[0:1, :], fln_ref[1:2, :])
    if OUT_W > D:
        y = jnp.concatenate(
            [y, jnp.zeros((OUT_ROWS, OUT_W - D), jnp.float32)], axis=-1)
    o_ref[...] = y


# ----------------------------- wrapper / pallas_call ---------------------------------
def _full_spec(arr):
    zeros = (0,) * arr.ndim
    return pl.BlockSpec(arr.shape, lambda i, z=zeros: z)


def patchify(imgs):
    # NCHW -> (B, N_patches, C*P*P), channel-major per patch (matches Conv2d weights)
    Bb = imgs.shape[0]
    x = imgs.reshape(Bb, C, NP_SIDE, PATCH, NP_SIDE, PATCH)
    x = x.transpose(0, 2, 4, 1, 3, 5)            # (B, nh, nw, C, ph, pw)
    return x.reshape(Bb, N_PATCH, PDIM)


@jax.jit
def frozen_vision_encoder(imgs, packed):
    """imgs: (B, 3, IMG, IMG) float32 in [0,1]  ->  (B, D) CLS embedding."""
    Bb = imgs.shape[0]
    assert Bb == B, "this synthetic script is specialized to the module batch size"

    patches = patchify(imgs)                                          # (B, N, PDIM)
    # prepend a zero row per image (the CLS slot; its token comes from tokbias),
    # pad the contraction dim to 256 and fold batch into the row dimension.
    patches_aug = jnp.concatenate(
        [jnp.zeros((Bb, 1, PDIM), patches.dtype), patches], axis=1)   # (B, S, PDIM)
    patches_aug = jnp.pad(patches_aug, ((0, 0), (0, 0), (0, PDIM_PAD - PDIM)))
    patches_flat = patches_aug.reshape(Bb * S, PDIM_PAD)              # (ROWS, PDIM_PAD)

    # per-image (block-diagonal) additive attention mask over the folded rows and
    # the CLS-row 0/1 selector (both compile-time constants under jit).
    row_img = jnp.arange(ROWS) // S
    attn_mask = jnp.where(row_img[:, None] == row_img[None, :],
                          0.0, NEG_INF).astype(jnp.float32)           # (ROWS, ROWS)
    sel = (jnp.arange(ROWS)[None, :] ==
           (jnp.arange(OUT_ROWS) * S)[:, None]).astype(jnp.float32)   # (OUT_ROWS, ROWS)

    tok_tiled = jnp.tile(packed["tokbias"], (Bb, 1))                  # (ROWS, D)

    out = pl.pallas_call(
        _encoder_kernel,
        out_shape=jax.ShapeDtypeStruct((OUT_ROWS, OUT_W), jnp.float32),
        grid=(1,),                                     # whole batch in one step
        in_specs=[
            _full_spec(patches_flat),
            _full_spec(attn_mask),
            _full_spec(sel),
            _full_spec(packed["pw"]),
            _full_spec(tok_tiled),
            _full_spec(packed["w_qkv"]),
            _full_spec(packed["w_out"]),
            _full_spec(packed["w_mlp1"]),
            _full_spec(packed["w_mlp2"]),
            _full_spec(packed["vec"]),
            _full_spec(packed["final_ln"]),
        ],
        out_specs=pl.BlockSpec((OUT_ROWS, OUT_W), lambda i: (0, 0)),
        compiler_params=pltpu.CompilerParams(
            dimension_semantics=("arbitrary",),
            vmem_limit_bytes=32 * 1024 * 1024),
    )(patches_flat, attn_mask, sel, packed["pw"], tok_tiled, packed["w_qkv"],
      packed["w_out"], packed["w_mlp1"], packed["w_mlp2"], packed["vec"],
      packed["final_ln"])
    return out[:Bb, :D]


# ----------------------------- params (raw + packed) ---------------------------------
def init_params(key):
    keys = jax.random.split(key, 4 + 6 * LAYERS)
    kit = iter(keys)

    def nrm(shape):
        return jax.random.normal(next(kit), shape, jnp.float32) * 0.02

    params = {
        "mean": jnp.array([0.485, 0.456, 0.406], jnp.float32),
        "std": jnp.array([0.229, 0.224, 0.225], jnp.float32),
        "patch_w": nrm((PDIM, D)),
        "patch_b": jnp.zeros((D,), jnp.float32),
        "cls": nrm((D,)),
        "pos": nrm((S, D)),
        "ln_g": jnp.ones((D,), jnp.float32),
        "ln_b": jnp.zeros((D,), jnp.float32),
        "layers": [],
    }
    for _ in range(LAYERS):
        params["layers"].append(dict(
            ln1_g=jnp.ones((D,), jnp.float32), ln1_b=jnp.zeros((D,), jnp.float32),
            wq=nrm((D, D)), bq=jnp.zeros((D,), jnp.float32),
            wk=nrm((D, D)), bk=jnp.zeros((D,), jnp.float32),
            wv=nrm((D, D)), bv=jnp.zeros((D,), jnp.float32),
            wo=nrm((D, D)), bo=jnp.zeros((D,), jnp.float32),
            ls1=jnp.full((D,), 0.1, jnp.float32),
            ln2_g=jnp.ones((D,), jnp.float32), ln2_b=jnp.zeros((D,), jnp.float32),
            w1=nrm((D, MLP)), b1=jnp.zeros((MLP,), jnp.float32),
            w2=nrm((MLP, D)), b2=jnp.zeros((D,), jnp.float32),
            ls2=jnp.full((D,), 0.1, jnp.float32),
        ))
    return params


def pack_params(p):
    """Fold the processor normalization into the patch weights, fuse Q/K/V into one
    (D, 3D) weight, pad the patch contraction dim to 256, and pack the small
    per-layer vectors into one (NVEC, VW) slab per layer."""
    mean_vec = jnp.repeat(p["mean"], PATCH * PATCH)           # (PDIM,) channel-major
    std_vec = jnp.repeat(p["std"], PATCH * PATCH)
    pw = p["patch_w"] / std_vec[:, None]                      # ((x-m)/s) @ W == x @ W' + b'
    pb = p["patch_b"] - (mean_vec / std_vec) @ p["patch_w"]
    tokbias = jnp.concatenate(
        [(p["cls"] + p["pos"][0])[None, :],                   # CLS + pos[0]
         p["pos"][1:] + pb[None, :]], axis=0)                 # pos + folded patch bias
    pw_pad = jnp.pad(pw, ((0, PDIM_PAD - PDIM), (0, 0)))      # zero K-padding (free)

    def pad_row(v):
        return jnp.pad(v, (0, VW - v.shape[0]))

    wqkv, wout, w1s, w2s, vecs = [], [], [], [], []
    for lp in p["layers"]:
        wqkv.append(jnp.concatenate([lp["wq"], lp["wk"], lp["wv"]], axis=-1))  # (D, 3D)
        wout.append(lp["wo"])                                                  # (D, D)
        w1s.append(lp["w1"])
        w2s.append(lp["w2"])
        bqkv = jnp.concatenate([lp["bq"], lp["bk"], lp["bv"]])                 # (3D,)
        vecs.append(jnp.stack([pad_row(lp["ln1_g"]), pad_row(lp["ln1_b"]),
                               pad_row(bqkv),
                               pad_row(lp["bo"]), pad_row(lp["ls1"]),
                               pad_row(lp["ln2_g"]), pad_row(lp["ln2_b"]),
                               pad_row(lp["b1"]), pad_row(lp["b2"]),
                               pad_row(lp["ls2"])]))                           # (NVEC, VW)

    return {
        "pw": pw_pad.astype(MXU_DTYPE),                       # (PDIM_PAD, D)
        "tokbias": tokbias,                                   # (S, D)        f32
        "w_qkv": jnp.stack(wqkv).astype(MXU_DTYPE),           # (L, D, 3D)
        "w_out": jnp.stack(wout).astype(MXU_DTYPE),           # (L, D, D)
        "w_mlp1": jnp.stack(w1s).astype(MXU_DTYPE),           # (L, D, MLP)
        "w_mlp2": jnp.stack(w2s).astype(MXU_DTYPE),           # (L, MLP, D)
        "vec": jnp.stack(vecs),                               # (L, NVEC, VW)  f32
        "final_ln": jnp.stack([p["ln_g"], p["ln_b"]]),        # (2, D)         f32
    }


if __name__ == "__main__":
    key = jax.random.PRNGKey(0)
    k_img, k_par = jax.random.split(key)
    imgs = jax.random.uniform(k_img, (B, C, IMG, IMG), jnp.float32)  # in [0, 1]
    params = init_params(k_par)
    packed = pack_params(params)

    out = frozen_vision_encoder(imgs, packed)
    out = jax.block_until_ready(out)
    assert out.shape == (B, D) and out.dtype == jnp.float32
    print("KERNEL_OK")
</pallas_src>

<mosaic_0001>
module attributes {stable_mosaic.version = 11 : i64} {
  func.func @_encoder_kernel(%arg0: i32, %arg1: memref<10x256xf32, #tpu.memory_space<vmem>>, %arg2: memref<10x10xf32, #tpu.memory_space<vmem>>, %arg3: memref<8x10xf32, #tpu.memory_space<vmem>>, %arg4: memref<256x32xbf16, #tpu.memory_space<vmem>>, %arg5: memref<10x32xf32, #tpu.memory_space<vmem>>, %arg6: memref<2x32x96xbf16, #tpu.memory_space<vmem>>, %arg7: memref<2x32x32xbf16, #tpu.memory_space<vmem>>, %arg8: memref<2x32x128xbf16, #tpu.memory_space<vmem>>, %arg9: memref<2x128x32xbf16, #tpu.memory_space<vmem>>, %arg10: memref<2x10x128xf32, #tpu.memory_space<vmem>>, %arg11: memref<2x32xf32, #tpu.memory_space<vmem>>, %arg12: memref<8x128xf32, #tpu.memory_space<vmem>>) attributes {dimension_semantics = [#tpu.dimension_semantics<arbitrary>], iteration_bounds = array<i64: 1>, scalar_prefetch = 0 : i64, scratch_operands = 0 : i64, tpu.core_type = #tpu.core_type<tc>, window_params = [{pipeline_mode = #tpu.pipeline_mode<synchronous>, transform_indices = @transform_0, window_bounds = array<i64: 10, 256>}, {pipeline_mode = #tpu.pipeline_mode<synchronous>, transform_indices = @transform_1, window_bounds = array<i64: 10, 10>}, {pipeline_mode = #tpu.pipeline_mode<synchronous>, transform_indices = @transform_2, window_bounds = array<i64: 8, 10>}, {pipeline_mode = #tpu.pipeline_mode<synchronous>, transform_indices = @transform_3, window_bounds = array<i64: 256, 32>}, {pipeline_mode = #tpu.pipeline_mode<synchronous>, transform_indices = @transform_4, window_bounds = array<i64: 10, 32>}, {pipeline_mode = #tpu.pipeline_mode<synchronous>, transform_indices = @transform_5, window_bounds = array<i64: 2, 32, 96>}, {pipeline_mode = #tpu.pipeline_mode<synchronous>, transform_indices = @transform_6, window_bounds = array<i64: 2, 32, 32>}, {pipeline_mode = #tpu.pipeline_mode<synchronous>, transform_indices = @transform_7, window_bounds = array<i64: 2, 32, 128>}, {pipeline_mode = #tpu.pipeline_mode<synchronous>, transform_indices = @transform_8, window_bounds = array<i64: 2, 128, 32>}, {pipeline_mode = #tpu.pipeline_mode<synchronous>, transform_indices = @transform_9, window_bounds = array<i64: 2, 10, 128>}, {pipeline_mode = #tpu.pipeline_mode<synchronous>, transform_indices = @transform_10, window_bounds = array<i64: 2, 32>}, {pipeline_mode = #tpu.pipeline_mode<synchronous>, transform_indices = @transform_11, window_bounds = array<i64: 8, 128>}]} {
    %c0 = arith.constant 0 : index
    %c0_0 = arith.constant 0 : index
    %0 = vector.load %arg1[%c0, %c0_0] : memref<10x256xf32, #tpu.memory_space<vmem>>, vector<10x256xf32>
    %1 = arith.truncf %0 : vector<10x256xf32> to vector<10x256xbf16>
    %c0_1 = arith.constant 0 : index
    %c0_2 = arith.constant 0 : index
    %2 = vector.load %arg4[%c0_1, %c0_2] : memref<256x32xbf16, #tpu.memory_space<vmem>>, vector<256x32xbf16>
    %cst = arith.constant dense<0.000000e+00> : vector<10x32xf32>
    %3 = tpu.matmul %1, %2, %cst {dimension_numbers = #tpu.dot_dimension_numbers<[1], [0], [0], [1], [0, 0, 1, 1], [], []>} : vector<10x256xbf16>, vector<256x32xbf16>, vector<10x32xf32> -> vector<10x32xf32>
    %c0_3 = arith.constant 0 : index
    %c0_4 = arith.constant 0 : index
    %4 = vector.load %arg5[%c0_3, %c0_4] : memref<10x32xf32, #tpu.memory_space<vmem>>, vector<10x32xf32>
    %5 = arith.addf %3, %4 : vector<10x32xf32>
    %c0_5 = arith.constant 0 : index
    %c0_6 = arith.constant 0 : index
    %6 = vector.load %arg2[%c0_5, %c0_6] : memref<10x10xf32, #tpu.memory_space<vmem>>, vector<10x10xf32>
    %c0_7 = arith.constant 0 : index
    %c0_8 = arith.constant 0 : index
    %c0_9 = arith.constant 0 : index
    %7 = vector.load %arg10[%c0_7, %c0_8, %c0_9] : memref<2x10x128xf32, #tpu.memory_space<vmem>>, vector<1x10x128xf32>
    %8 = vector.shape_cast %7 : vector<1x10x128xf32> to vector<10x128xf32>
    %9 = vector.extract_strided_slice %8 {offsets = [0, 0], sizes = [1, 32], strides = [1, 1]} : vector<10x128xf32> to vector<1x32xf32>
    %10 = vector.extract_strided_slice %8 {offsets = [1, 0], sizes = [1, 32], strides = [1, 1]} : vector<10x128xf32> to vector<1x32xf32>
    %11 = vector.extract_strided_slice %8 {offsets = [2, 0], sizes = [1, 96], strides = [1, 1]} : vector<10x128xf32> to vector<1x96xf32>
    %12 = vector.extract_strided_slice %8 {offsets = [3, 0], sizes = [1, 32], strides = [1, 1]} : vector<10x128xf32> to vector<1x32xf32>
    %13 = vector.extract_strided_slice %8 {offsets = [4, 0], sizes = [1, 32], strides = [1, 1]} : vector<10x128xf32> to vector<1x32xf32>
    %14 = vector.extract_strided_slice %8 {offsets = [5, 0], sizes = [1, 32], strides = [1, 1]} : vector<10x128xf32> to vector<1x32xf32>
    %15 = vector.extract_strided_slice %8 {offsets = [6, 0], sizes = [1, 32], strides = [1, 1]} : vector<10x128xf32> to vector<1x32xf32>
    %16 = vector.extract_strided_slice %8 {offsets = [7, 0], sizes = [1, 128], strides = [1, 1]} : vector<10x128xf32> to vector<1x128xf32>
    %17 = vector.extract_strided_slice %8 {offsets = [8, 0], sizes = [1, 32], strides = [1, 1]} : vector<10x128xf32> to vector<1x32xf32>
    %18 = vector.extract_strided_slice %8 {offsets = [9, 0], sizes = [1, 32], strides = [1, 1]} : vector<10x128xf32> to vector<1x32xf32>
    %cst_10 = arith.constant dense<0.000000e+00> : vector<10xf32>
    %19 = vector.multi_reduction <add>, %5, %cst_10 [1] : vector<10x32xf32> to vector<10xf32>
    %20 = vector.shape_cast %19 : vector<10xf32> to vector<10x1xf32>
    %cst_11 = arith.constant 3.200000e+01 : f32
    %21 = vector.broadcast %cst_11 : f32 to vector<10x1xf32>
    %22 = arith.divf %20, %21 : vector<10x1xf32>
    %23 = vector.broadcast %22 : vector<10x1xf32> to vector<10x32xf32>
    %24 = arith.subf %5, %23 : vector<10x32xf32>
    %25 = arith.mulf %24, %24 : vector<10x32xf32>
    %cst_12 = arith.constant dense<0.000000e+00> : vector<10xf32>
    %26 = vector.multi_reduction <add>, %25, %cst_12 [1] : vector<10x32xf32> to vector<10xf32>
    %27 = vector.shape_cast %26 : vector<10xf32> to vector<10x1xf32>
    %cst_13 = arith.constant 3.200000e+01 : f32
    %28 = vector.broadcast %cst_13 : f32 to vector<10x1xf32>
    %29 = arith.divf %27, %28 : vector<10x1xf32>
    %30 = vector.broadcast %22 : vector<10x1xf32> to vector<10x32xf32>
    %31 = arith.subf %5, %30 : vector<10x32xf32>
    %cst_14 = arith.constant 9.99999997E-7 : f32
    %32 = vector.broadcast %cst_14 : f32 to vector<10x1xf32>
    %33 = arith.addf %29, %32 : vector<10x1xf32>
    %34 = math.rsqrt %33 : vector<10x1xf32>
    %35 = vector.broadcast %34 : vector<10x1xf32> to vector<10x32xf32>
    %36 = arith.mulf %31, %35 : vector<10x32xf32>
    %37 = vector.broadcast %9 : vector<1x32xf32> to vector<10x32xf32>
    %38 = arith.mulf %36, %37 : vector<10x32xf32>
    %39 = vector.broadcast %10 : vector<1x32xf32> to vector<10x32xf32>
    %40 = arith.addf %38, %39 : vector<10x32xf32>
    %41 = arith.truncf %40 : vector<10x32xf32> to vector<10x32xbf16>
    %c0_15 = arith.constant 0 : index
    %c0_16 = arith.constant 0 : index
    %c0_17 = arith.constant 0 : index
    %42 = vector.load %arg6[%c0_15, %c0_16, %c0_17] : memref<2x32x96xbf16, #tpu.memory_space<vmem>>, vector<1x32x96xbf16>
    %43 = vector.shape_cast %42 : vector<1x32x96xbf16> to vector<32x96xbf16>
    %cst_18 = arith.constant dense<0.000000e+00> : vector<10x96xf32>
    %44 = tpu.matmul %41, %43, %cst_18 {dimension_numbers = #tpu.dot_dimension_numbers<[1], [0], [0], [1], [0, 0, 1, 1], [], []>} : vector<10x32xbf16>, vector<32x96xbf16>, vector<10x96xf32> -> vector<10x96xf32>
    %45 = vector.broadcast %11 : vector<1x96xf32> to vector<10x96xf32>
    %46 = arith.addf %44, %45 : vector<10x96xf32>
    %47 = vector.extract_strided_slice %46 {offsets = [0, 0], sizes = [10, 16], strides = [1, 1]} : vector<10x96xf32> to vector<10x16xf32>
    %48 = arith.truncf %47 : vector<10x16xf32> to vector<10x16xbf16>
    %49 = vector.extract_strided_slice %46 {offsets = [0, 32], sizes = [10, 16], strides = [1, 1]} : vector<10x96xf32> to vector<10x16xf32>
    %50 = arith.truncf %49 : vector<10x16xf32> to vector<10x16xbf16>
    %51 = vector.extract_strided_slice %46 {offsets = [0, 64], sizes = [10, 16], strides = [1, 1]} : vector<10x96xf32> to vector<10x16xf32>
    %52 = arith.truncf %51 : vector<10x16xf32> to vector<10x16xbf16>
    "tpu.trace_start"() <{level = 10 : i32, message = "qe,ke->qk"}> : () -> ()
    %cst_19 = arith.constant dense<0.000000e+00> : vector<10x10xf32>
    %53 = tpu.matmul %48, %50, %cst_19 {dimension_numbers = #tpu.dot_dimension_numbers<[1], [1], [0], [0], [0, 0, 1, 0], [], []>} : vector<10x16xbf16>, vector<10x16xbf16>, vector<10x10xf32> -> vector<10x10xf32>
    "tpu.trace_stop"() : () -> ()
    %cst_20 = arith.constant 2.500000e-01 : f32
    %54 = vector.broadcast %cst_20 : f32 to vector<10x10xf32>
    %55 = arith.mulf %53, %54 : vector<10x10xf32>
    %56 = arith.addf %55, %6 : vector<10x10xf32>
    %cst_21 = arith.constant dense<0xFF800000> : vector<10xf32>
    %57 = vector.multi_reduction <maximumf>, %56, %cst_21 [1] : vector<10x10xf32> to vector<10xf32>
    %58 = vector.shape_cast %57 : vector<10xf32> to vector<10x1xf32>
    %59 = vector.broadcast %58 : vector<10x1xf32> to vector<10x10xf32>
    %60 = arith.subf %56, %59 : vector<10x10xf32>
    %61 = math.exp %60 : vector<10x10xf32>
    %cst_22 = arith.constant dense<0.000000e+00> : vector<10xf32>
    %62 = vector.multi_reduction <add>, %61, %cst_22 [1] : vector<10x10xf32> to vector<10xf32>
    %63 = vector.shape_cast %62 : vector<10xf32> to vector<10x1xf32>
    %64 = tpu.reciprocal %63 {approx = true} : vector<10x1xf32> -> vector<10x1xf32>
    %65 = vector.broadcast %64 : vector<10x1xf32> to vector<10x10xf32>
    %66 = arith.mulf %61, %65 : vector<10x10xf32>
    %67 = arith.truncf %66 : vector<10x10xf32> to vector<10x10xbf16>
    "tpu.trace_start"() <{level = 10 : i32, message = "qk,ke->qe"}> : () -> ()
    %cst_23 = arith.constant dense<0.000000e+00> : vector<10x16xf32>
    %68 = tpu.matmul %67, %52, %cst_23 {dimension_numbers = #tpu.dot_dimension_numbers<[1], [0], [0], [1], [0, 0, 1, 1], [], []>} : vector<10x10xbf16>, vector<10x16xbf16>, vector<10x16xf32> -> vector<10x16xf32>
    "tpu.trace_stop"() : () -> ()
    %69 = vector.extract_strided_slice %46 {offsets = [0, 16], sizes = [10, 16], strides = [1, 1]} : vector<10x96xf32> to vector<10x16xf32>
    %70 = arith.truncf %69 : vector<10x16xf32> to vector<10x16xbf16>
    %71 = vector.extract_strided_slice %46 {offsets = [0, 48], sizes = [10, 16], strides = [1, 1]} : vector<10x96xf32> to vector<10x16xf32>
    %72 = arith.truncf %71 : vector<10x16xf32> to vector<10x16xbf16>
    %73 = vector.extract_strided_slice %46 {offsets = [0, 80], sizes = [10, 16], strides = [1, 1]} : vector<10x96xf32> to vector<10x16xf32>
    %74 = arith.truncf %73 : vector<10x16xf32> to vector<10x16xbf16>
    "tpu.trace_start"() <{level = 10 : i32, message = "qe,ke->qk"}> : () -> ()
    %cst_24 = arith.constant dense<0.000000e+00> : vector<10x10xf32>
    %75 = tpu.matmul %70, %72, %cst_24 {dimension_numbers = #tpu.dot_dimension_numbers<[1], [1], [0], [0], [0, 0, 1, 0], [], []>} : vector<10x16xbf16>, vector<10x16xbf16>, vector<10x10xf32> -> vector<10x10xf32>
    "tpu.trace_stop"() : () -> ()
    %cst_25 = arith.constant 2.500000e-01 : f32
    %76 = vector.broadcast %cst_25 : f32 to vector<10x10xf32>
    %77 = arith.mulf %75, %76 : vector<10x10xf32>
    %78 = arith.addf %77, %6 : vector<10x10xf32>
    %cst_26 = arith.constant dense<0xFF800000> : vector<10xf32>
    %79 = vector.multi_reduction <maximumf>, %78, %cst_26 [1] : vector<10x10xf32> to vector<10xf32>
    %80 = vector.shape_cast %79 : vector<10xf32> to vector<10x1xf32>
    %81 = vector.broadcast %80 : vector<10x1xf32> to vector<10x10xf32>
    %82 = arith.subf %78, %81 : vector<10x10xf32>
    %83 = math.exp %82 : vector<10x10xf32>
    %cst_27 = arith.constant dense<0.000000e+00> : vector<10xf32>
    %84 = vector.multi_reduction <add>, %83, %cst_27 [1] : vector<10x10xf32> to vector<10xf32>
    %85 = vector.shape_cast %84 : vector<10xf32> to vector<10x1xf32>
    %86 = tpu.reciprocal %85 {approx = true} : vector<10x1xf32> -> vector<10x1xf32>
    %87 = vector.broadcast %86 : vector<10x1xf32> to vector<10x10xf32>
    %88 = arith.mulf %83, %87 : vector<10x10xf32>
    %89 = arith.truncf %88 : vector<10x10xf32> to vector<10x10xbf16>
    "tpu.trace_start"() <{level = 10 : i32, message = "qk,ke->qe"}> : () -> ()
    %cst_28 = arith.constant dense<0.000000e+00> : vector<10x16xf32>
    %90 = tpu.matmul %89, %74, %cst_28 {dimension_numbers = #tpu.dot_dimension_numbers<[1], [0], [0], [1], [0, 0, 1, 1], [], []>} : vector<10x10xbf16>, vector<10x16xbf16>, vector<10x16xf32> -> vector<10x16xf32>
    "tpu.trace_stop"() : () -> ()
    %91 = tpu.concatenate %68, %90 in 1 : vector<10x16xf32>, vector<10x16xf32> -> vector<10x32xf32>
    %92 = arith.truncf %91 : vector<10x32xf32> to vector<10x32xbf16>
    %c0_29 = arith.constant 0 : index
    %c0_30 = arith.constant 0 : index
    %c0_31 = arith.constant 0 : index
    %93 = vector.load %arg7[%c0_29, %c0_30, %c0_31] : memref<2x32x32xbf16, #tpu.memory_space<vmem>>, vector<1x32x32xbf16>
    %94 = vector.shape_cast %93 : vector<1x32x32xbf16> to vector<32x32xbf16>
    %cst_32 = arith.constant dense<0.000000e+00> : vector<10x32xf32>
    %95 = tpu.matmul %92, %94, %cst_32 {dimension_numbers = #tpu.dot_dimension_numbers<[1], [0], [0], [1], [0, 0, 1, 1], [], []>} : vector<10x32xbf16>, vector<32x32xbf16>, vector<10x32xf32> -> vector<10x32xf32>
    %96 = vector.broadcast %12 : vector<1x32xf32> to vector<10x32xf32>
    %97 = arith.addf %95, %96 : vector<10x32xf32>
    %98 = vector.broadcast %13 : vector<1x32xf32> to vector<10x32xf32>
    %99 = arith.mulf %98, %97 : vector<10x32xf32>
    %100 = arith.addf %5, %99 : vector<10x32xf32>
    %cst_33 = arith.constant dense<0.000000e+00> : vector<10xf32>
    %101 = vector.multi_reduction <add>, %100, %cst_33 [1] : vector<10x32xf32> to vector<10xf32>
    %102 = vector.shape_cast %101 : vector<10xf32> to vector<10x1xf32>
    %cst_34 = arith.constant 3.200000e+01 : f32
    %103 = vector.broadcast %cst_34 : f32 to vector<10x1xf32>
    %104 = arith.divf %102, %103 : vector<10x1xf32>
    %105 = vector.broadcast %104 : vector<10x1xf32> to vector<10x32xf32>
    %106 = arith.subf %100, %105 : vector<10x32xf32>
    %107 = arith.mulf %106, %106 : vector<10x32xf32>
    %cst_35 = arith.constant dense<0.000000e+00> : vector<10xf32>
    %108 = vector.multi_reduction <add>, %107, %cst_35 [1] : vector<10x32xf32> to vector<10xf32>
    %109 = vector.shape_cast %108 : vector<10xf32> to vector<10x1xf32>
    %cst_36 = arith.constant 3.200000e+01 : f32
    %110 = vector.broadcast %cst_36 : f32 to vector<10x1xf32>
    %111 = arith.divf %109, %110 : vector<10x1xf32>
    %112 = vector.broadcast %104 : vector<10x1xf32> to vector<10x32xf32>
    %113 = arith.subf %100, %112 : vector<10x32xf32>
    %cst_37 = arith.constant 9.99999997E-7 : f32
    %114 = vector.broadcast %cst_37 : f32 to vector<10x1xf32>
    %115 = arith.addf %111, %114 : vector<10x1xf32>
    %116 = math.rsqrt %115 : vector<10x1xf32>
    %117 = vector.broadcast %116 : vector<10x1xf32> to vector<10x32xf32>
    %118 = arith.mulf %113, %117 : vector<10x32xf32>
    %119 = vector.broadcast %14 : vector<1x32xf32> to vector<10x32xf32>
    %120 = arith.mulf %118, %119 : vector<10x32xf32>
    %121 = vector.broadcast %15 : vector<1x32xf32> to vector<10x32xf32>
    %122 = arith.addf %120, %121 : vector<10x32xf32>
    %123 = arith.truncf %122 : vector<10x32xf32> to vector<10x32xbf16>
    %c0_38 = arith.constant 0 : index
    %c0_39 = arith.constant 0 : index
    %c0_40 = arith.constant 0 : index
    %124 = vector.load %arg8[%c0_38, %c0_39, %c0_40] : memref<2x32x128xbf16, #tpu.memory_space<vmem>>, vector<1x32x128xbf16>
    %125 = vector.shape_cast %124 : vector<1x32x128xbf16> to vector<32x128xbf16>
    %cst_41 = arith.constant dense<0.000000e+00> : vector<10x128xf32>
    %126 = tpu.matmul %123, %125, %cst_41 {dimension_numbers = #tpu.dot_dimension_numbers<[1], [0], [0], [1], [0, 0, 1, 1], [], []>} : vector<10x32xbf16>, vector<32x128xbf16>, vector<10x128xf32> -> vector<10x128xf32>
    %127 = vector.broadcast %16 : vector<1x128xf32> to vector<10x128xf32>
    %128 = arith.addf %126, %127 : vector<10x128xf32>
    %cst_42 = arith.constant 5.000000e-01 : f32
    %129 = vector.broadcast %cst_42 : f32 to vector<10x128xf32>
    %130 = arith.mulf %129, %128 : vector<10x128xf32>
    %cst_43 = arith.constant 0.707106769 : f32
    %131 = vector.broadcast %cst_43 : f32 to vector<10x128xf32>
    %132 = arith.mulf %128, %131 : vector<10x128xf32>
    %133 = math.absf %132 : vector<10x128xf32>
    %cst_44 = arith.constant 0.327591091 : f32
    %134 = vector.broadcast %cst_44 : f32 to vector<10x128xf32>
    %135 = arith.mulf %134, %133 : vector<10x128xf32>
    %cst_45 = arith.constant 1.000000e+00 : f32
    %136 = vector.broadcast %cst_45 : f32 to vector<10x128xf32>
    %137 = arith.addf %136, %135 : vector<10x128xf32>
    %cst_46 = arith.constant 1.000000e+00 : f32
    %138 = vector.broadcast %cst_46 : f32 to vector<10x128xf32>
    %139 = arith.divf %138, %137 : vector<10x128xf32>
    %cst_47 = arith.constant 1.06140542 : f32
    %140 = vector.broadcast %cst_47 : f32 to vector<10x128xf32>
    %141 = arith.mulf %140, %139 : vector<10x128xf32>
    %cst_48 = arith.constant -1.45315206 : f32
    %142 = vector.broadcast %cst_48 : f32 to vector<10x128xf32>
    %143 = arith.addf %141, %142 : vector<10x128xf32>
    %144 = arith.mulf %143, %139 : vector<10x128xf32>
    %cst_49 = arith.constant 1.42141378 : f32
    %145 = vector.broadcast %cst_49 : f32 to vector<10x128xf32>
    %146 = arith.addf %144, %145 : vector<10x128xf32>
    %147 = arith.mulf %146, %139 : vector<10x128xf32>
    %cst_50 = arith.constant -0.284496725 : f32
    %148 = vector.broadcast %cst_50 : f32 to vector<10x128xf32>
    %149 = arith.addf %147, %148 : vector<10x128xf32>
    %150 = arith.mulf %149, %139 : vector<10x128xf32>
    %cst_51 = arith.constant 0.254829586 : f32
    %151 = vector.broadcast %cst_51 : f32 to vector<10x128xf32>
    %152 = arith.addf %150, %151 : vector<10x128xf32>
    %153 = arith.mulf %152, %139 : vector<10x128xf32>
    %154 = arith.mulf %132, %132 : vector<10x128xf32>
    %cst_52 = arith.constant 0.000000e+00 : f32
    %155 = vector.broadcast %cst_52 : f32 to vector<10x128xf32>
    %156 = arith.subf %155, %154 : vector<10x128xf32>
    %157 = math.exp %156 : vector<10x128xf32>
    %158 = arith.mulf %153, %157 : vector<10x128xf32>
    %cst_53 = arith.constant 1.000000e+00 : f32
    %159 = vector.broadcast %cst_53 : f32 to vector<10x128xf32>
    %160 = arith.subf %159, %158 : vector<10x128xf32>
    %cst_54 = arith.constant 0.000000e+00 : f32
    %161 = vector.broadcast %cst_54 : f32 to vector<10x128xf32>
    %162 = arith.cmpf oge, %132, %161 : vector<10x128xf32>
    %cst_55 = arith.constant 0.000000e+00 : f32
    %163 = vector.broadcast %cst_55 : f32 to vector<10x128xf32>
    %164 = arith.subf %163, %160 : vector<10x128xf32>
    %165 = arith.select %162, %160, %164 : vector<10x128xi1>, vector<10x128xf32>
    %cst_56 = arith.constant 1.000000e+00 : f32
    %166 = vector.broadcast %cst_56 : f32 to vector<10x128xf32>
    %167 = arith.addf %166, %165 : vector<10x128xf32>
    %168 = arith.mulf %130, %167 : vector<10x128xf32>
    %169 = arith.truncf %168 : vector<10x128xf32> to vector<10x128xbf16>
    %c0_57 = arith.constant 0 : index
    %c0_58 = arith.constant 0 : index
    %c0_59 = arith.constant 0 : index
    %170 = vector.load %arg9[%c0_57, %c0_58, %c0_59] : memref<2x128x32xbf16, #tpu.memory_space<vmem>>, vector<1x128x32xbf16>
    %171 = vector.shape_cast %170 : vector<1x128x32xbf16> to vector<128x32xbf16>
    %cst_60 = arith.constant dense<0.000000e+00> : vector<10x32xf32>
    %172 = tpu.matmul %169, %171, %cst_60 {dimension_numbers = #tpu.dot_dimension_numbers<[1], [0], [0], [1], [0, 0, 1, 1], [], []>} : vector<10x128xbf16>, vector<128x32xbf16>, vector<10x32xf32> -> vector<10x32xf32>
    %173 = vector.broadcast %17 : vector<1x32xf32> to vector<10x32xf32>
    %174 = arith.addf %172, %173 : vector<10x32xf32>
    %175 = vector.broadcast %18 : vector<1x32xf32> to vector<10x32xf32>
    %176 = arith.mulf %175, %174 : vector<10x32xf32>
    %177 = arith.addf %100, %176 : vector<10x32xf32>
    %c1 = arith.constant 1 : index
    %c0_61 = arith.constant 0 : index
    %c0_62 = arith.constant 0 : index
    %178 = vector.load %arg10[%c1, %c0_61, %c0_62] : memref<2x10x128xf32, #tpu.memory_space<vmem>>, vector<1x10x128xf32>
    %179 = vector.shape_cast %178 : vector<1x10x128xf32> to vector<10x128xf32>
    %180 = vector.extract_strided_slice %179 {offsets = [0, 0], sizes = [1, 32], strides = [1, 1]} : vector<10x128xf32> to vector<1x32xf32>
    %181 = vector.extract_strided_slice %179 {offsets = [1, 0], sizes = [1, 32], strides = [1, 1]} : vector<10x128xf32> to vector<1x32xf32>
    %182 = vector.extract_strided_slice %179 {offsets = [2, 0], sizes = [1, 96], strides = [1, 1]} : vector<10x128xf32> to vector<1x96xf32>
    %183 = vector.extract_strided_slice %179 {offsets = [3, 0], sizes = [1, 32], strides = [1, 1]} : vector<10x128xf32> to vector<1x32xf32>
    %184 = vector.extract_strided_slice %179 {offsets = [4, 0], sizes = [1, 32], strides = [1, 1]} : vector<10x128xf32> to vector<1x32xf32>
    %185 = vector.extract_strided_slice %179 {offsets = [5, 0], sizes = [1, 32], strides = [1, 1]} : vector<10x128xf32> to vector<1x32xf32>
    %186 = vector.extract_strided_slice %179 {offsets = [6, 0], sizes = [1, 32], strides = [1, 1]} : vector<10x128xf32> to vector<1x32xf32>
    %187 = vector.extract_strided_slice %179 {offsets = [7, 0], sizes = [1, 128], strides = [1, 1]} : vector<10x128xf32> to vector<1x128xf32>
    %188 = vector.extract_strided_slice %179 {offsets = [8, 0], sizes = [1, 32], strides = [1, 1]} : vector<10x128xf32> to vector<1x32xf32>
    %189 = vector.extract_strided_slice %179 {offsets = [9, 0], sizes = [1, 32], strides = [1, 1]} : vector<10x128xf32> to vector<1x32xf32>
    %cst_63 = arith.constant dense<0.000000e+00> : vector<10xf32>
    %190 = vector.multi_reduction <add>, %177, %cst_63 [1] : vector<10x32xf32> to vector<10xf32>
    %191 = vector.shape_cast %190 : vector<10xf32> to vector<10x1xf32>
    %cst_64 = arith.constant 3.200000e+01 : f32
    %192 = vector.broadcast %cst_64 : f32 to vector<10x1xf32>
    %193 = arith.divf %191, %192 : vector<10x1xf32>
    %194 = vector.broadcast %193 : vector<10x1xf32> to vector<10x32xf32>
    %195 = arith.subf %177, %194 : vector<10x32xf32>
    %196 = arith.mulf %195, %195 : vector<10x32xf32>
    %cst_65 = arith.constant dense<0.000000e+00> : vector<10xf32>
    %197 = vector.multi_reduction <add>, %196, %cst_65 [1] : vector<10x32xf32> to vector<10xf32>
    %198 = vector.shape_cast %197 : vector<10xf32> to vector<10x1xf32>
    %cst_66 = arith.constant 3.200000e+01 : f32
    %199 = vector.broadcast %cst_66 : f32 to vector<10x1xf32>
    %200 = arith.divf %198, %199 : vector<10x1xf32>
    %201 = vector.broadcast %193 : vector<10x1xf32> to vector<10x32xf32>
    %202 = arith.subf %177, %201 : vector<10x32xf32>
    %cst_67 = arith.constant 9.99999997E-7 : f32
    %203 = vector.broadcast %cst_67 : f32 to vector<10x1xf32>
    %204 = arith.addf %200, %203 : vector<10x1xf32>
    %205 = math.rsqrt %204 : vector<10x1xf32>
    %206 = vector.broadcast %205 : vector<10x1xf32> to vector<10x32xf32>
    %207 = arith.mulf %202, %206 : vector<10x32xf32>
    %208 = vector.broadcast %180 : vector<1x32xf32> to vector<10x32xf32>
    %209 = arith.mulf %207, %208 : vector<10x32xf32>
    %210 = vector.broadcast %181 : vector<1x32xf32> to vector<10x32xf32>
    %211 = arith.addf %209, %210 : vector<10x32xf32>
    %212 = arith.truncf %211 : vector<10x32xf32> to vector<10x32xbf16>
    %c1_68 = arith.constant 1 : index
    %c0_69 = arith.constant 0 : index
    %c0_70 = arith.constant 0 : index
    %213 = vector.load %arg6[%c1_68, %c0_69, %c0_70] : memref<2x32x96xbf16, #tpu.memory_space<vmem>>, vector<1x32x96xbf16>
    %214 = vector.shape_cast %213 : vector<1x32x96xbf16> to vector<32x96xbf16>
    %cst_71 = arith.constant dense<0.000000e+00> : vector<10x96xf32>
    %215 = tpu.matmul %212, %214, %cst_71 {dimension_numbers = #tpu.dot_dimension_numbers<[1], [0], [0], [1], [0, 0, 1, 1], [], []>} : vector<10x32xbf16>, vector<32x96xbf16>, vector<10x96xf32> -> vector<10x96xf32>
    %216 = vector.broadcast %182 : vector<1x96xf32> to vector<10x96xf32>
    %217 = arith.addf %215, %216 : vector<10x96xf32>
    %218 = vector.extract_strided_slice %217 {offsets = [0, 0], sizes = [10, 16], strides = [1, 1]} : vector<10x96xf32> to vector<10x16xf32>
    %219 = arith.truncf %218 : vector<10x16xf32> to vector<10x16xbf16>
    %220 = vector.extract_strided_slice %217 {offsets = [0, 32], sizes = [10, 16], strides = [1, 1]} : vector<10x96xf32> to vector<10x16xf32>
    %221 = arith.truncf %220 : vector<10x16xf32> to vector<10x16xbf16>
    %222 = vector.extract_strided_slice %217 {offsets = [0, 64], sizes = [10, 16], strides = [1, 1]} : vector<10x96xf32> to vector<10x16xf32>
    %223 = arith.truncf %222 : vector<10x16xf32> to vector<10x16xbf16>
    "tpu.trace_start"() <{level = 10 : i32, message = "qe,ke->qk"}> : () -> ()
    %cst_72 = arith.constant dense<0.000000e+00> : vector<10x10xf32>
    %224 = tpu.matmul %219, %221, %cst_72 {dimension_numbers = #tpu.dot_dimension_numbers<[1], [1], [0], [0], [0, 0, 1, 0], [], []>} : vector<10x16xbf16>, vector<10x16xbf16>, vector<10x10xf32> -> vector<10x10xf32>
    "tpu.trace_stop"() : () -> ()
    %cst_73 = arith.constant 2.500000e-01 : f32
    %225 = vector.broadcast %cst_73 : f32 to vector<10x10xf32>
    %226 = arith.mulf %224, %225 : vector<10x10xf32>
    %227 = arith.addf %226, %6 : vector<10x10xf32>
    %cst_74 = arith.constant dense<0xFF800000> : vector<10xf32>
    %228 = vector.multi_reduction <maximumf>, %227, %cst_74 [1] : vector<10x10xf32> to vector<10xf32>
    %229 = vector.shape_cast %228 : vector<10xf32> to vector<10x1xf32>
    %230 = vector.broadcast %229 : vector<10x1xf32> to vector<10x10xf32>
    %231 = arith.subf %227, %230 : vector<10x10xf32>
    %232 = math.exp %231 : vector<10x10xf32>
    %cst_75 = arith.constant dense<0.000000e+00> : vector<10xf32>
    %233 = vector.multi_reduction <add>, %232, %cst_75 [1] : vector<10x10xf32> to vector<10xf32>
    %234 = vector.shape_cast %233 : vector<10xf32> to vector<10x1xf32>
    %235 = tpu.reciprocal %234 {approx = true} : vector<10x1xf32> -> vector<10x1xf32>
    %236 = vector.broadcast %235 : vector<10x1xf32> to vector<10x10xf32>
    %237 = arith.mulf %232, %236 : vector<10x10xf32>
    %238 = arith.truncf %237 : vector<10x10xf32> to vector<10x10xbf16>
    "tpu.trace_start"() <{level = 10 : i32, message = "qk,ke->qe"}> : () -> ()
    %cst_76 = arith.constant dense<0.000000e+00> : vector<10x16xf32>
    %239 = tpu.matmul %238, %223, %cst_76 {dimension_numbers = #tpu.dot_dimension_numbers<[1], [0], [0], [1], [0, 0, 1, 1], [], []>} : vector<10x10xbf16>, vector<10x16xbf16>, vector<10x16xf32> -> vector<10x16xf32>
    "tpu.trace_stop"() : () -> ()
    %240 = vector.extract_strided_slice %217 {offsets = [0, 16], sizes = [10, 16], strides = [1, 1]} : vector<10x96xf32> to vector<10x16xf32>
    %241 = arith.truncf %240 : vector<10x16xf32> to vector<10x16xbf16>
    %242 = vector.extract_strided_slice %217 {offsets = [0, 48], sizes = [10, 16], strides = [1, 1]} : vector<10x96xf32> to vector<10x16xf32>
    %243 = arith.truncf %242 : vector<10x16xf32> to vector<10x16xbf16>
    %244 = vector.extract_strided_slice %217 {offsets = [0, 80], sizes = [10, 16], strides = [1, 1]} : vector<10x96xf32> to vector<10x16xf32>
    %245 = arith.truncf %244 : vector<10x16xf32> to vector<10x16xbf16>
    "tpu.trace_start"() <{level = 10 : i32, message = "qe,ke->qk"}> : () -> ()
    %cst_77 = arith.constant dense<0.000000e+00> : vector<10x10xf32>
    %246 = tpu.matmul %241, %243, %cst_77 {dimension_numbers = #tpu.dot_dimension_numbers<[1], [1], [0], [0], [0, 0, 1, 0], [], []>} : vector<10x16xbf16>, vector<10x16xbf16>, vector<10x10xf32> -> vector<10x10xf32>
    "tpu.trace_stop"() : () -> ()
    %cst_78 = arith.constant 2.500000e-01 : f32
    %247 = vector.broadcast %cst_78 : f32 to vector<10x10xf32>
    %248 = arith.mulf %246, %247 : vector<10x10xf32>
    %249 = arith.addf %248, %6 : vector<10x10xf32>
    %cst_79 = arith.constant dense<0xFF800000> : vector<10xf32>
    %250 = vector.multi_reduction <maximumf>, %249, %cst_79 [1] : vector<10x10xf32> to vector<10xf32>
    %251 = vector.shape_cast %250 : vector<10xf32> to vector<10x1xf32>
    %252 = vector.broadcast %251 : vector<10x1xf32> to vector<10x10xf32>
    %253 = arith.subf %249, %252 : vector<10x10xf32>
    %254 = math.exp %253 : vector<10x10xf32>
    %cst_80 = arith.constant dense<0.000000e+00> : vector<10xf32>
    %255 = vector.multi_reduction <add>, %254, %cst_80 [1] : vector<10x10xf32> to vector<10xf32>
    %256 = vector.shape_cast %255 : vector<10xf32> to vector<10x1xf32>
    %257 = tpu.reciprocal %256 {approx = true} : vector<10x1xf32> -> vector<10x1xf32>
    %258 = vector.broadcast %257 : vector<10x1xf32> to vector<10x10xf32>
    %259 = arith.mulf %254, %258 : vector<10x10xf32>
    %260 = arith.truncf %259 : vector<10x10xf32> to vector<10x10xbf16>
    "tpu.trace_start"() <{level = 10 : i32, message = "qk,ke->qe"}> : () -> ()
    %cst_81 = arith.constant dense<0.000000e+00> : vector<10x16xf32>
    %261 = tpu.matmul %260, %245, %cst_81 {dimension_numbers = #tpu.dot_dimension_numbers<[1], [0], [0], [1], [0, 0, 1, 1], [], []>} : vector<10x10xbf16>, vector<10x16xbf16>, vector<10x16xf32> -> vector<10x16xf32>
    "tpu.trace_stop"() : () -> ()
    %262 = tpu.concatenate %239, %261 in 1 : vector<10x16xf32>, vector<10x16xf32> -> vector<10x32xf32>
    %263 = arith.truncf %262 : vector<10x32xf32> to vector<10x32xbf16>
    %c1_82 = arith.constant 1 : index
    %c0_83 = arith.constant 0 : index
    %c0_84 = arith.constant 0 : index
    %264 = vector.load %arg7[%c1_82, %c0_83, %c0_84] : memref<2x32x32xbf16, #tpu.memory_space<vmem>>, vector<1x32x32xbf16>
    %265 = vector.shape_cast %264 : vector<1x32x32xbf16> to vector<32x32xbf16>
    %cst_85 = arith.constant dense<0.000000e+00> : vector<10x32xf32>
    %266 = tpu.matmul %263, %265, %cst_85 {dimension_numbers = #tpu.dot_dimension_numbers<[1], [0], [0], [1], [0, 0, 1, 1], [], []>} : vector<10x32xbf16>, vector<32x32xbf16>, vector<10x32xf32> -> vector<10x32xf32>
    %267 = vector.broadcast %183 : vector<1x32xf32> to vector<10x32xf32>
    %268 = arith.addf %266, %267 : vector<10x32xf32>
    %269 = vector.broadcast %184 : vector<1x32xf32> to vector<10x32xf32>
    %270 = arith.mulf %269, %268 : vector<10x32xf32>
    %271 = arith.addf %177, %270 : vector<10x32xf32>
    %cst_86 = arith.constant dense<0.000000e+00> : vector<10xf32>
    %272 = vector.multi_reduction <add>, %271, %cst_86 [1] : vector<10x32xf32> to vector<10xf32>
    %273 = vector.shape_cast %272 : vector<10xf32> to vector<10x1xf32>
    %cst_87 = arith.constant 3.200000e+01 : f32
    %274 = vector.broadcast %cst_87 : f32 to vector<10x1xf32>
    %275 = arith.divf %273, %274 : vector<10x1xf32>
    %276 = vector.broadcast %275 : vector<10x1xf32> to vector<10x32xf32>
    %277 = arith.subf %271, %276 : vector<10x32xf32>
    %278 = arith.mulf %277, %277 : vector<10x32xf32>
    %cst_88 = arith.constant dense<0.000000e+00> : vector<10xf32>
    %279 = vector.multi_reduction <add>, %278, %cst_88 [1] : vector<10x32xf32> to vector<10xf32>
    %280 = vector.shape_cast %279 : vector<10xf32> to vector<10x1xf32>
    %cst_89 = arith.constant 3.200000e+01 : f32
    %281 = vector.broadcast %cst_89 : f32 to vector<10x1xf32>
    %282 = arith.divf %280, %281 : vector<10x1xf32>
    %283 = vector.broadcast %275 : vector<10x1xf32> to vector<10x32xf32>
    %284 = arith.subf %271, %283 : vector<10x32xf32>
    %cst_90 = arith.constant 9.99999997E-7 : f32
    %285 = vector.broadcast %cst_90 : f32 to vector<10x1xf32>
    %286 = arith.addf %282, %285 : vector<10x1xf32>
    %287 = math.rsqrt %286 : vector<10x1xf32>
    %288 = vector.broadcast %287 : vector<10x1xf32> to vector<10x32xf32>
    %289 = arith.mulf %284, %288 : vector<10x32xf32>
    %290 = vector.broadcast %185 : vector<1x32xf32> to vector<10x32xf32>
    %291 = arith.mulf %289, %290 : vector<10x32xf32>
    %292 = vector.broadcast %186 : vector<1x32xf32> to vector<10x32xf32>
    %293 = arith.addf %291, %292 : vector<10x32xf32>
    %294 = arith.truncf %293 : vector<10x32xf32> to vector<10x32xbf16>
    %c1_91 = arith.constant 1 : index
    %c0_92 = arith.constant 0 : index
    %c0_93 = arith.constant 0 : index
    %295 = vector.load %arg8[%c1_91, %c0_92, %c0_93] : memref<2x32x128xbf16, #tpu.memory_space<vmem>>, vector<1x32x128xbf16>
    %296 = vector.shape_cast %295 : vector<1x32x128xbf16> to vector<32x128xbf16>
    %cst_94 = arith.constant dense<0.000000e+00> : vector<10x128xf32>
    %297 = tpu.matmul %294, %296, %cst_94 {dimension_numbers = #tpu.dot_dimension_numbers<[1], [0], [0], [1], [0, 0, 1, 1], [], []>} : vector<10x32xbf16>, vector<32x128xbf16>, vector<10x128xf32> -> vector<10x128xf32>
    %298 = vector.broadcast %187 : vector<1x128xf32> to vector<10x128xf32>
    %299 = arith.addf %297, %298 : vector<10x128xf32>
    %cst_95 = arith.constant 5.000000e-01 : f32
    %300 = vector.broadcast %cst_95 : f32 to vector<10x128xf32>
    %301 = arith.mulf %300, %299 : vector<10x128xf32>
    %cst_96 = arith.constant 0.707106769 : f32
    %302 = vector.broadcast %cst_96 : f32 to vector<10x128xf32>
    %303 = arith.mulf %299, %302 : vector<10x128xf32>
    %304 = math.absf %303 : vector<10x128xf32>
    %cst_97 = arith.constant 0.327591091 : f32
    %305 = vector.broadcast %cst_97 : f32 to vector<10x128xf32>
    %306 = arith.mulf %305, %304 : vector<10x128xf32>
    %cst_98 = arith.constant 1.000000e+00 : f32
    %307 = vector.broadcast %cst_98 : f32 to vector<10x128xf32>
    %308 = arith.addf %307, %306 : vector<10x128xf32>
    %cst_99 = arith.constant 1.000000e+00 : f32
    %309 = vector.broadcast %cst_99 : f32 to vector<10x128xf32>
    %310 = arith.divf %309, %308 : vector<10x128xf32>
    %cst_100 = arith.constant 1.06140542 : f32
    %311 = vector.broadcast %cst_100 : f32 to vector<10x128xf32>
    %312 = arith.mulf %311, %310 : vector<10x128xf32>
    %cst_101 = arith.constant -1.45315206 : f32
    %313 = vector.broadcast %cst_101 : f32 to vector<10x128xf32>
    %314 = arith.addf %312, %313 : vector<10x128xf32>
    %315 = arith.mulf %314, %310 : vector<10x128xf32>
    %cst_102 = arith.constant 1.42141378 : f32
    %316 = vector.broadcast %cst_102 : f32 to vector<10x128xf32>
    %317 = arith.addf %315, %316 : vector<10x128xf32>
    %318 = arith.mulf %317, %310 : vector<10x128xf32>
    %cst_103 = arith.constant -0.284496725 : f32
    %319 = vector.broadcast %cst_103 : f32 to vector<10x128xf32>
    %320 = arith.addf %318, %319 : vector<10x128xf32>
    %321 = arith.mulf %320, %310 : vector<10x128xf32>
    %cst_104 = arith.constant 0.254829586 : f32
    %322 = vector.broadcast %cst_104 : f32 to vector<10x128xf32>
    %323 = arith.addf %321, %322 : vector<10x128xf32>
    %324 = arith.mulf %323, %310 : vector<10x128xf32>
    %325 = arith.mulf %303, %303 : vector<10x128xf32>
    %cst_105 = arith.constant 0.000000e+00 : f32
    %326 = vector.broadcast %cst_105 : f32 to vector<10x128xf32>
    %327 = arith.subf %326, %325 : vector<10x128xf32>
    %328 = math.exp %327 : vector<10x128xf32>
    %329 = arith.mulf %324, %328 : vector<10x128xf32>
    %cst_106 = arith.constant 1.000000e+00 : f32
    %330 = vector.broadcast %cst_106 : f32 to vector<10x128xf32>
    %331 = arith.subf %330, %329 : vector<10x128xf32>
    %cst_107 = arith.constant 0.000000e+00 : f32
    %332 = vector.broadcast %cst_107 : f32 to vector<10x128xf32>
    %333 = arith.cmpf oge, %303, %332 : vector<10x128xf32>
    %cst_108 = arith.constant 0.000000e+00 : f32
    %334 = vector.broadcast %cst_108 : f32 to vector<10x128xf32>
    %335 = arith.subf %334, %331 : vector<10x128xf32>
    %336 = arith.select %333, %331, %335 : vector<10x128xi1>, vector<10x128xf32>
    %cst_109 = arith.constant 1.000000e+00 : f32
    %337 = vector.broadcast %cst_109 : f32 to vector<10x128xf32>
    %338 = arith.addf %337, %336 : vector<10x128xf32>
    %339 = arith.mulf %301, %338 : vector<10x128xf32>
    %340 = arith.truncf %339 : vector<10x128xf32> to vector<10x128xbf16>
    %c1_110 = arith.constant 1 : index
    %c0_111 = arith.constant 0 : index
    %c0_112 = arith.constant 0 : index
    %341 = vector.load %arg9[%c1_110, %c0_111, %c0_112] : memref<2x128x32xbf16, #tpu.memory_space<vmem>>, vector<1x128x32xbf16>
    %342 = vector.shape_cast %341 : vector<1x128x32xbf16> to vector<128x32xbf16>
    %cst_113 = arith.constant dense<0.000000e+00> : vector<10x32xf32>
    %343 = tpu.matmul %340, %342, %cst_113 {dimension_numbers = #tpu.dot_dimension_numbers<[1], [0], [0], [1], [0, 0, 1, 1], [], []>} : vector<10x128xbf16>, vector<128x32xbf16>, vector<10x32xf32> -> vector<10x32xf32>
    %344 = vector.broadcast %188 : vector<1x32xf32> to vector<10x32xf32>
    %345 = arith.addf %343, %344 : vector<10x32xf32>
    %346 = vector.broadcast %189 : vector<1x32xf32> to vector<10x32xf32>
    %347 = arith.mulf %346, %345 : vector<10x32xf32>
    %348 = arith.addf %271, %347 : vector<10x32xf32>
    %c0_114 = arith.constant 0 : index
    %c0_115 = arith.constant 0 : index
    %349 = vector.load %arg3[%c0_114, %c0_115] : memref<8x10xf32, #tpu.memory_space<vmem>>, vector<8x10xf32>
    %cst_116 = arith.constant dense<0.000000e+00> : vector<8x32xf32>
    %350 = tpu.matmul %349, %348, %cst_116 {dimension_numbers = #tpu.dot_dimension_numbers<[1], [0], [0], [1], [0, 0, 1, 1], [], []>} : vector<8x10xf32>, vector<10x32xf32>, vector<8x32xf32> -> vector<8x32xf32>
    %c0_117 = arith.constant 0 : index
    %c0_118 = arith.constant 0 : index
    %351 = vector.load %arg11[%c0_117, %c0_118] : memref<2x32xf32, #tpu.memory_space<vmem>>, vector<1x32xf32>
    %c1_119 = arith.constant 1 : index
    %c0_120 = arith.constant 0 : index
    %352 = vector.load %arg11[%c1_119, %c0_120] : memref<2x32xf32, #tpu.memory_space<vmem>>, vector<1x32xf32>
    %cst_121 = arith.constant dense<0.000000e+00> : vector<8xf32>
    %353 = vector.multi_reduction <add>, %350, %cst_121 [1] : vector<8x32xf32> to vector<8xf32>
    %354 = vector.shape_cast %353 : vector<8xf32> to vector<8x1xf32>
    %cst_122 = arith.constant 3.200000e+01 : f32
    %355 = vector.broadcast %cst_122 : f32 to vector<8x1xf32>
    %356 = arith.divf %354, %355 : vector<8x1xf32>
    %357 = vector.broadcast %356 : vector<8x1xf32> to vector<8x32xf32>
    %358 = arith.subf %350, %357 : vector<8x32xf32>
    %359 = arith.mulf %358, %358 : vector<8x32xf32>
    %cst_123 = arith.constant dense<0.000000e+00> : vector<8xf32>
    %360 = vector.multi_reduction <add>, %359, %cst_123 [1] : vector<8x32xf32> to vector<8xf32>
    %361 = vector.shape_cast %360 : vector<8xf32> to vector<8x1xf32>
    %cst_124 = arith.constant 3.200000e+01 : f32
    %362 = vector.broadcast %cst_124 : f32 to vector<8x1xf32>
    %363 = arith.divf %361, %362 : vector<8x1xf32>
    %364 = vector.broadcast %356 : vector<8x1xf32> to vector<8x32xf32>
    %365 = arith.subf %350, %364 : vector<8x32xf32>
    %cst_125 = arith.constant 9.99999997E-7 : f32
    %366 = vector.broadcast %cst_125 : f32 to vector<8x1xf32>
    %367 = arith.addf %363, %366 : vector<8x1xf32>
    %368 = math.rsqrt %367 : vector<8x1xf32>
    %369 = vector.broadcast %368 : vector<8x1xf32> to vector<8x32xf32>
    %370 = arith.mulf %365, %369 : vector<8x32xf32>
    %371 = vector.broadcast %351 : vector<1x32xf32> to vector<8x32xf32>
    %372 = arith.mulf %370, %371 : vector<8x32xf32>
    %373 = vector.broadcast %352 : vector<1x32xf32> to vector<8x32xf32>
    %374 = arith.addf %372, %373 : vector<8x32xf32>
    %cst_126 = arith.constant 0.000000e+00 : f32
    %375 = vector.broadcast %cst_126 : f32 to vector<8x96xf32>
    %376 = tpu.concatenate %374, %375 in 1 : vector<8x32xf32>, vector<8x96xf32> -> vector<8x128xf32>
    %c0_127 = arith.constant 0 : index
    %c0_128 = arith.constant 0 : index
    %377 = vector.load %arg12[%c0_127, %c0_128] : memref<8x128xf32, #tpu.memory_space<vmem>>, vector<8x128xf32>
    tpu.vector_store %arg12[%c0_127, %c0_128], %376 {strides = array<i32>} : memref<8x128xf32, #tpu.memory_space<vmem>>, vector<8x128xf32>,
    return
  }
  func.func @transform_0(%arg0: i32) -> (i32, i32) {
    %c0_i32 = arith.constant 0 : i32
    %c0_i32_0 = arith.constant 0 : i32
    %c0_i32_1 = arith.constant 0 : i32
    return %c0_i32, %c0_i32_0 : i32, i32
  }
  func.func @transform_1(%arg0: i32) -> (i32, i32) {
    %c0_i32 = arith.constant 0 : i32
    %c0_i32_0 = arith.constant 0 : i32
    %c0_i32_1 = arith.constant 0 : i32
    return %c0_i32, %c0_i32_0 : i32, i32
  }
  func.func @transform_2(%arg0: i32) -> (i32, i32) {
    %c0_i32 = arith.constant 0 : i32
    %c0_i32_0 = arith.constant 0 : i32
    %c0_i32_1 = arith.constant 0 : i32
    return %c0_i32, %c0_i32_0 : i32, i32
  }
  func.func @transform_3(%arg0: i32) -> (i32, i32) {
    %c0_i32 = arith.constant 0 : i32
    %c0_i32_0 = arith.constant 0 : i32
    %c0_i32_1 = arith.constant 0 : i32
    return %c0_i32, %c0_i32_0 : i32, i32
  }
  func.func @transform_4(%arg0: i32) -> (i32, i32) {
    %c0_i32 = arith.constant 0 : i32
    %c0_i32_0 = arith.constant 0 : i32
    %c0_i32_1 = arith.constant 0 : i32
    return %c0_i32, %c0_i32_0 : i32, i32
  }
  func.func @transform_5(%arg0: i32) -> (i32, i32, i32) {
    %c0_i32 = arith.constant 0 : i32
    %c0_i32_0 = arith.constant 0 : i32
    %c0_i32_1 = arith.constant 0 : i32
    %c0_i32_2 = arith.constant 0 : i32
    return %c0_i32, %c0_i32_0, %c0_i32_1 : i32, i32, i32
  }
  func.func @transform_6(%arg0: i32) -> (i32, i32, i32) {
    %c0_i32 = arith.constant 0 : i32
    %c0_i32_0 = arith.constant 0 : i32
    %c0_i32_1 = arith.constant 0 : i32
    %c0_i32_2 = arith.constant 0 : i32
    return %c0_i32, %c0_i32_0, %c0_i32_1 : i32, i32, i32
  }
  func.func @transform_7(%arg0: i32) -> (i32, i32, i32) {
    %c0_i32 = arith.constant 0 : i32
    %c0_i32_0 = arith.constant 0 : i32
    %c0_i32_1 = arith.constant 0 : i32
    %c0_i32_2 = arith.constant 0 : i32
    return %c0_i32, %c0_i32_0, %c0_i32_1 : i32, i32, i32
  }
  func.func @transform_8(%arg0: i32) -> (i32, i32, i32) {
    %c0_i32 = arith.constant 0 : i32
    %c0_i32_0 = arith.constant 0 : i32
    %c0_i32_1 = arith.constant 0 : i32
    %c0_i32_2 = arith.constant 0 : i32
    return %c0_i32, %c0_i32_0, %c0_i32_1 : i32, i32, i32
  }
  func.func @transform_9(%arg0: i32) -> (i32, i32, i32) {
    %c0_i32 = arith.constant 0 : i32
    %c0_i32_0 = arith.constant 0 : i32
    %c0_i32_1 = arith.constant 0 : i32
    %c0_i32_2 = arith.constant 0 : i32
    return %c0_i32, %c0_i32_0, %c0_i32_1 : i32, i32, i32
  }
  func.func @transform_10(%arg0: i32) -> (i32, i32) {
    %c0_i32 = arith.constant 0 : i32
    %c0_i32_0 = arith.constant 0 : i32
    %c0_i32_1 = arith.constant 0 : i32
    return %c0_i32, %c0_i32_0 : i32, i32
  }
  func.func @transform_11(%arg0: i32) -> (i32, i32) {
    %c0_i32 = arith.constant 0 : i32
    %c0_i32_0 = arith.constant 0 : i32
    %c0_i32_1 = arith.constant 0 : i32
    return %c0_i32, %c0_i32_0 : i32, i32
  }
}

</mosaic_0001>

<llo_original>
// kernel: tile.9
$region0: #{tile.9}
  %s0 = inlined_call_operand.vmem [shape: f32[2,5,32], index: 0, kind: input, shape index: {}]
  %s1 = inlined_call_operand.vmem [shape: f32[10,32], index: 1, kind: output, shape index: {}]
  %v2 = vld [vmem:[%s0] sm:$0x1f]
  %vm3 = vcmask 261120
  %4 = vst.msk [vmem:[%s1] sm:$0x1f] %vm3, %v2
  %s5 = scalar_lea.vmem %s0, 8
  %v6 = vld [vmem:[%s5] sm:$0x1f]
  %vm7 = vcmask 261120
  %s8 = scalar_lea.vmem %s1, 5
  %9 = vst.msk [vmem:[%s8] sm:$0x1f] %vm7, %v6

// kernel: frozen_vision_encoder.1
$region0: #{frozen_vision_encoder.1}
  #allocation0 [shape = 'u32[]', space=smem, size = 0x4, offset = 0x4, fixed_abs, tag = 'smem constant byte address 0x4 - core index']
  #allocation1 [shape = 'u32[144,128]{1,0:T(1,128)}', space=vmem, size = 0x12000, scoped, tag = 'internal scratch']
  %s0 = inlined_call_operand.vmem [shape: f32[10,256], index: 0, kind: input, shape index: {}]
  %s1 = inlined_call_operand.vmem [shape: f32[10,10], index: 1, kind: input, shape index: {}]
  %s2 = inlined_call_operand.vmem [shape: f32[8,10], index: 2, kind: input, shape index: {}]
  %s3 = inlined_call_operand.vmem [shape: bf16[256,32], index: 3, kind: input, shape index: {}]
  %s4 = inlined_call_operand.vmem [shape: f32[10,32], index: 4, kind: input, shape index: {}]
  %s5 = inlined_call_operand.vmem [shape: bf16[2,32,96], index: 5, kind: input, shape index: {}]
  %s6 = inlined_call_operand.vmem [shape: bf16[2,32,32], index: 6, kind: input, shape index: {}]
  %s7 = inlined_call_operand.vmem [shape: bf16[2,32,128], index: 7, kind: input, shape index: {}]
  %s8 = inlined_call_operand.vmem [shape: bf16[2,128,32], index: 8, kind: input, shape index: {}]
  %s9 = inlined_call_operand.vmem [shape: f32[2,10,128], index: 9, kind: input, shape index: {}]
  %s10 = inlined_call_operand.vmem [shape: f32[2,32], index: 10, kind: input, shape index: {}]
  %s11 = inlined_call_operand.vmem [shape: f32[8,128], index: 11, kind: output, shape index: {}]
  %s12 = sld [smem:[#allocation0]]
  $region54: #{frozen_vision_encoder.1} parent=0
    _
  %s14 = ssub.s32 1, %s12
  %s15 = scalar_select 0, %s14, %s12
  // Predicated region
  $region2: #{frozen_vision_encoder.1} parent=0 // pred_check
    _
  $region3: #{frozen_vision_encoder.1} parent=0 // pred_check_branch
    %17 = sbr.rel (0) target = $region5
  $region4: #{frozen_vision_encoder.1} parent=0 // pred_region
    _
  $region5: #{frozen_vision_encoder.1} parent=0 // pred_fallthru
    _
  // Predicated region
  $region6: #{frozen_vision_encoder.1} parent=0 // pred_check
    _
  $region7: #{frozen_vision_encoder.1} parent=0 // pred_check_branch
    %19 = sbr.rel (0) target = $region9
  $region8: #{frozen_vision_encoder.1} parent=0 // pred_region
    _
  $region9: #{frozen_vision_encoder.1} parent=0 // pred_fallthru
    _
  // Predicated region
  $region10: #{frozen_vision_encoder.1} parent=0 // pred_check
    _
  $region11: #{frozen_vision_encoder.1} parent=0 // pred_check_branch
    %21 = sbr.rel (0) target = $region13
  $region12: #{frozen_vision_encoder.1} parent=0 // pred_region
    _
  $region13: #{frozen_vision_encoder.1} parent=0 // pred_fallthru
    _
  // Predicated region
  $region14: #{frozen_vision_encoder.1} parent=0 // pred_check
    _
  $region15: #{frozen_vision_encoder.1} parent=0 // pred_check_branch
    %23 = sbr.rel (0) target = $region17
  $region16: #{frozen_vision_encoder.1} parent=0 // pred_region
    _
  $region17: #{frozen_vision_encoder.1} parent=0 // pred_fallthru
    _
  // Predicated region
  $region18: #{frozen_vision_encoder.1} parent=0 // pred_check
    _
  $region19: #{frozen_vision_encoder.1} parent=0 // pred_check_branch
    %25 = sbr.rel (0) target = $region21
  $region20: #{frozen_vision_encoder.1} parent=0 // pred_region
    _
  $region21: #{frozen_vision_encoder.1} parent=0 // pred_fallthru
    _
  // Predicated region
  $region22: #{frozen_vision_encoder.1} parent=0 // pred_check
    _
  $region23: #{frozen_vision_encoder.1} parent=0 // pred_check_branch
    %27 = sbr.rel (0) target = $region25
  $region24: #{frozen_vision_encoder.1} parent=0 // pred_region
    _
  $region25: #{frozen_vision_encoder.1} parent=0 // pred_fallthru
    _
  // Predicated region
  $region26: #{frozen_vision_encoder.1} parent=0 // pred_check
    _
  $region27: #{frozen_vision_encoder.1} parent=0 // pred_check_branch
    %29 = sbr.rel (0) target = $region29
  $region28: #{frozen_vision_encoder.1} parent=0 // pred_region
    _
  $region29: #{frozen_vision_encoder.1} parent=0 // pred_fallthru
    _
  // Predicated region
  $region30: #{frozen_vision_encoder.1} parent=0 // pred_check
    _
  $region31: #{frozen_vision_encoder.1} parent=0 // pred_check_branch
    %31 = sbr.rel (0) target = $region33
  $region32: #{frozen_vision_encoder.1} parent=0 // pred_region
    _
  $region33: #{frozen_vision_encoder.1} parent=0 // pred_fallthru
    _
  // Predicated region
  $region34: #{frozen_vision_encoder.1} parent=0 // pred_check
    _
  $region35: #{frozen_vision_encoder.1} parent=0 // pred_check_branch
    %33 = sbr.rel (0) target = $region37
  $region36: #{frozen_vision_encoder.1} parent=0 // pred_region
    _
  $region37: #{frozen_vision_encoder.1} parent=0 // pred_fallthru
    _
  // Predicated region
  $region38: #{frozen_vision_encoder.1} parent=0 // pred_check
    _
  $region39: #{frozen_vision_encoder.1} parent=0 // pred_check_branch
    %35 = sbr.rel (0) target = $region41
  $region40: #{frozen_vision_encoder.1} parent=0 // pred_region
    _
  $region41: #{frozen_vision_encoder.1} parent=0 // pred_fallthru
    _
  // Predicated region
  $region42: #{frozen_vision_encoder.1} parent=0 // pred_check
    _
  $region43: #{frozen_vision_encoder.1} parent=0 // pred_check_branch
    %37 = sbr.rel (0) target = $region45
  $region44: #{frozen_vision_encoder.1} parent=0 // pred_region
    _
  $region45: #{frozen_vision_encoder.1} parent=0 // pred_fallthru
    _
  %v39 = vld [vmem:[%s0] sm:$0xff]
  %v40 = vld [vmem:[%s0 + $0x8] sm:$0xff]
  %v41 = vld [vmem:[%s0 + $0x10] sm:$0x3]
  %v42 = vld [vmem:[%s0 + $0x18] sm:$0x3]
  %v43 = vpack.c.bf16 %v41, %v39
  %v44 = vpack.c.bf16 %v42, %v40
  %v45 = vld [vmem:[%s3] sm:$0xf]
  %v46 = vld [vmem:[%s3 + $0x4] sm:$0xf]
  %v47 = vld [vmem:[%s3 + $0x8] sm:$0xf]
  %v48 = vld [vmem:[%s3 + $0xc] sm:$0xf]
  %v49 = vld [vmem:[%s3 + $0x10] sm:$0xf]
  %v50 = vld [vmem:[%s3 + $0x14] sm:$0xf]
  %v51 = vld [vmem:[%s3 + $0x18] sm:$0xf]
  %v52 = vld [vmem:[%s3 + $0x1c] sm:$0xf]
  %v53 = vld [vmem:[%s3 + $0x20] sm:$0xf]
  %v54 = vld [vmem:[%s3 + $0x24] sm:$0xf]
  %v55 = vld [vmem:[%s3 + $0x28] sm:$0xf]
  %v56 = vld [vmem:[%s3 + $0x2c] sm:$0xf]
  %v57 = vld [vmem:[%s3 + $0x30] sm:$0xf]
  %v58 = vld [vmem:[%s3 + $0x34] sm:$0xf]
  %v59 = vld [vmem:[%s3 + $0x38] sm:$0xf]
  %v60 = vld [vmem:[%s3 + $0x3c] sm:$0xf]
  %v61 = vld [vmem:[%s3 + $0x40] sm:$0xf]
  %v62 = vld [vmem:[%s3 + $0x44] sm:$0xf]
  %v63 = vld [vmem:[%s3 + $0x48] sm:$0xf]
  %v64 = vld [vmem:[%s3 + $0x4c] sm:$0xf]
  %v65 = vld [vmem:[%s3 + $0x50] sm:$0xf]
  %v66 = vld [vmem:[%s3 + $0x54] sm:$0xf]
  %v67 = vld [vmem:[%s3 + $0x58] sm:$0xf]
  %v68 = vld [vmem:[%s3 + $0x5c] sm:$0xf]
  %v69 = vld [vmem:[%s3 + $0x60] sm:$0xf]
  %v70 = vld [vmem:[%s3 + $0x64] sm:$0xf]
  %v71 = vld [vmem:[%s3 + $0x68] sm:$0xf]
  %v72 = vld [vmem:[%s3 + $0x6c] sm:$0xf]
  %v73 = vld [vmem:[%s3 + $0x70] sm:$0xf]
  %v74 = vld [vmem:[%s3 + $0x74] sm:$0xf]
  %v75 = vld [vmem:[%s3 + $0x78] sm:$0xf]
  %v76 = vld [vmem:[%s3 + $0x7c] sm:$0xf]
  %v77 = vld [vmem:[%s4] sm:$0xff]
  %v78 = vld [vmem:[%s4 + $0x8] sm:$0x3]
  %v111 = vunpack.c.l.b16 %v45
  %v112 = vunpack.c.l.b16 %v46
  %v113 = vunpack.c.l.b16 %v47
  %v114 = vunpack.c.l.b16 %v48
  %v115 = vunpack.c.l.b16 %v49
  %v116 = vunpack.c.l.b16 %v50
  %v117 = vunpack.c.l.b16 %v51
  %v118 = vunpack.c.l.b16 %v52
  %v119 = vunpack.c.l.b16 %v53
  %v120 = vunpack.c.l.b16 %v54
  %v121 = vunpack.c.l.b16 %v55
  %v122 = vunpack.c.l.b16 %v56
  %v123 = vunpack.c.l.b16 %v57
  %v124 = vunpack.c.l.b16 %v58
  %v125 = vunpack.c.l.b16 %v59
  %v126 = vunpack.c.l.b16 %v60
  %v127 = vunpack.c.l.b16 %v61
  %v128 = vunpack.c.l.b16 %v62
  %v129 = vunpack.c.l.b16 %v63
  %v130 = vunpack.c.l.b16 %v64
  %v131 = vunpack.c.l.b16 %v65
  %v132 = vunpack.c.l.b16 %v66
  %v133 = vunpack.c.l.b16 %v67
  %v134 = vunpack.c.l.b16 %v68
  %v135 = vunpack.c.l.b16 %v69
  %v136 = vunpack.c.l.b16 %v70
  %v137 = vunpack.c.l.b16 %v71
  %v138 = vunpack.c.l.b16 %v72
  %v139 = vunpack.c.l.b16 %v73
  %v140 = vunpack.c.l.b16 %v74
  %v141 = vunpack.c.l.b16 %v75
  %v142 = vunpack.c.l.b16 %v76
  %v143 = vpack.c.b16 %v112, %v111
  %v144 = vpack.c.b16 %v114, %v113
  %v145 = vpack.c.b16 %v116, %v115
  %v146 = vpack.c.b16 %v118, %v117
  %v147 = vpack.c.b16 %v120, %v119
  %v148 = vpack.c.b16 %v122, %v121
  %v149 = vpack.c.b16 %v124, %v123
  %v150 = vpack.c.b16 %v126, %v125
  %v151 = vpack.c.b16 %v128, %v127
  %v152 = vpack.c.b16 %v130, %v129
  %v153 = vpack.c.b16 %v132, %v131
  %v154 = vpack.c.b16 %v134, %v133
  %v155 = vpack.c.b16 %v136, %v135
  %v156 = vpack.c.b16 %v138, %v137
  %v157 = vpack.c.b16 %v140, %v139
  %v158 = vpack.c.b16 %v142, %v141
  %175 = vmatprep.subr.bf16.mxu0 0
  %176 = vmatpush1.bf16.msra.mxu0 %v143
  %177 = vmatprep.subr.bf16.mxu0 0
  %178 = vmatpush1.bf16.msra.mxu0 %v144
  %179 = vmatprep.subr.bf16.mxu0 0
  %180 = vmatpush1.bf16.msra.mxu0 %v145
  %181 = vmatprep.subr.bf16.mxu0 0
  %182 = vmatpush1.bf16.msra.mxu0 %v146
  %183 = vmatprep.subr.bf16.mxu0 0
  %184 = vmatpush1.bf16.msra.mxu0 %v147
  %185 = vmatprep.subr.bf16.mxu0 0
  %186 = vmatpush1.bf16.msra.mxu0 %v148
  %187 = vmatprep.subr.bf16.mxu0 0
  %188 = vmatpush1.bf16.msra.mxu0 %v149
  %189 = vmatprep.subr.bf16.mxu0 0
  %190 = vmatpush1.bf16.msra.mxu0 %v150
  %191 = vmatprep.subr.bf16.mxu0 0
  %192 = vmatpush1.bf16.msra.mxu0 %v151
  %193 = vmatprep.subr.bf16.mxu0 0
  %194 = vmatpush1.bf16.msra.mxu0 %v152
  %195 = vmatprep.subr.bf16.mxu0 0
  %196 = vmatpush1.bf16.msra.mxu0 %v153
  %197 = vmatprep.subr.bf16.mxu0 0
  %198 = vmatpush1.bf16.msra.mxu0 %v154
  %199 = vmatprep.subr.bf16.mxu0 0
  %200 = vmatpush1.bf16.msra.mxu0 %v155
  %201 = vmatprep.subr.bf16.mxu0 0
  %202 = vmatpush1.bf16.msra.mxu0 %v156
  %203 = vmatprep.subr.bf16.mxu0 0
  %204 = vmatpush1.bf16.msra.mxu0 %v157
  %205 = vmatprep.subr.bf16.mxu0 0
  %206 = vmatpush1.bf16.msra.mxu0 %v158
  %207 = vmatprep.mubr.bf16.mxu0 %v44
  %208 = vmatmul.mubr.bf16.gmra.mrb[0].mxu0 %v43
  %v209 = vpop.f32.mrb[0].mxu0
  %v210 = vadd.f32 %v77, %v209
  %v211 = vpop.f32.mrb[0].mxu0
  %v212 = vpop.f32.mrb[0].mxu0
  %v213 = vadd.f32 %v78, %v212
  %v214 = vpop.f32.mrb[0].mxu0
  %215 = vdwg.mxu0
  %v216 = vld [vmem:[%s1] sm:$0xff]
  %v217 = vld [vmem:[%s1 + $0x8] sm:$0x3]
  %v218 = vld [vmem:[%s9] sm:$0xff]
  %v219 = vld [vmem:[%s9 + $0x8] sm:$0x3]
  %vm220 = vcmask 261120
  %v221 = vsel %vm220, %v210, 0.0
  %222 = vadd.xlane.f32.xlu0 %v221
  %v223 = vpop.xlane.xlu0 %222
  %vm224 = vcmask 254976
  %v225 = vsel %vm224, %v213, 0.0
  %226 = vadd.xlane.f32.xlu0 %v225
  %v227 = vpop.xlane.xlu0 %226
  %v228 = vrcp.pop 32.0
  %v229 = vmul.f32 %v223, %v228
  %v230 = vmul.f32 %v227, %v228
  %v231 = vsub.f32 %v210, %v229
  %v232 = vsub.f32 %v213, %v230
  %v233 = vmul.f32 %v231, %v231
  %v234 = vmul.f32 %v232, %v232
  %v235 = vsel %vm220, %v233, 0.0
  %236 = vadd.xlane.f32.xlu0 %v235
  %v237 = vpop.xlane.xlu0 %236
  %v238 = vsel %vm224, %v234, 0.0
  %239 = vadd.xlane.f32.xlu0 %v238
  %v240 = vpop.xlane.xlu0 %239
  %v241 = vmul.f32 %v237, %v228
  %v242 = vmul.f32 %v240, %v228
  %v243 = vadd.f32 %v241, 1e-06
  %v244 = vadd.f32 %v242, 1e-06
  %v245 = vrsqrt.pop %v243
  %v246 = vrsqrt.pop %v244
  %v247 = vmul.f32 %v231, %v245
  %v248 = vmul.f32 %v232, %v246
  %v249 = vlaneseq
  %v250 = vshrl.u32 %v249, 7
  %v251 = vsub.s32 0, %v250
  %v252 = vrot.slane %v218, %v251
  %v253 = vmul.f32 %v247, %v252
  %v254 = vmul.f32 %v248, %v252
  %v255 = vlaneseq
  %v256 = vshrl.u32 %v255, 7
  %v257 = vsub.s32 1, %v256
  %v258 = vrot.slane %v218, %v257
  %v259 = vadd.f32 %v253, %v258
  %v260 = vadd.f32 %v254, %v258
  %v261 = vpack.c.bf16 %v260, %v259
  %v262 = vld [vmem:[%s5] sm:$0xf]
  %v263 = vld [vmem:[%s5 + $0x4] sm:$0xf]
  %v264 = vld [vmem:[%s5 + $0x8] sm:$0xf]
  %v265 = vld [vmem:[%s5 + $0xc] sm:$0xf]
  %v266 = vlaneseq
  %v267 = vshrl.u32 %v266, 7
  %v268 = vsub.s32 2, %v267
  %v269 = vrot.slane %v218, %v268
  %v274 = vunpack.c.l.b16 %v262
  %v275 = vunpack.c.l.b16 %v263
  %v276 = vunpack.c.l.b16 %v264
  %v277 = vunpack.c.l.b16 %v265
  %v278 = vpack.c.b16 %v275, %v274
  %v279 = vpack.c.b16 %v277, %v276
  %v283 = vsel %vm220, %v261, 0
  %285 = vmatprep.subr.bf16.mxu0 0
  %286 = vmatpush1.bf16.msra.mxu0 %v278
  %287 = vmatprep.subr.bf16.mxu0 0
  %288 = vmatpush1.bf16.msra.mxu0 %v279
  %289 = vmatprep.subr.bf16.mxu0 0
  %290 = vmatpush1.bf16.msra.mxu0 0
  %291 = vmatprep.subr.bf16.mxu0 0
  %292 = vmatpush1.bf16.msra.mxu0 0
  %293 = vmatprep.subr.bf16.mxu0 0
  %294 = vmatpush1.bf16.msra.mxu0 0
  %295 = vmatprep.subr.bf16.mxu0 0
  %296 = vmatpush1.bf16.msra.mxu0 0
  %297 = vmatprep.subr.bf16.mxu0 0
  %298 = vmatpush1.bf16.msra.mxu0 0
  %299 = vmatprep.subr.bf16.mxu0 0
  %300 = vmatpush1.bf16.msra.mxu0 0
  %301 = vmatprep.subr.bf16.mxu0 0
  %302 = vmatpush1.bf16.msra.mxu0 0
  %303 = vmatprep.subr.bf16.mxu0 0
  %304 = vmatpush1.bf16.msra.mxu0 0
  %305 = vmatprep.subr.bf16.mxu0 0
  %306 = vmatpush1.bf16.msra.mxu0 0
  %307 = vmatprep.subr.bf16.mxu0 0
  %308 = vmatpush1.bf16.msra.mxu0 0
  %309 = vmatprep.subr.bf16.mxu0 0
  %310 = vmatpush1.bf16.msra.mxu0 0
  %311 = vmatprep.subr.bf16.mxu0 0
  %312 = vmatpush1.bf16.msra.mxu0 0
  %313 = vmatprep.subr.bf16.mxu0 0
  %314 = vmatpush1.bf16.msra.mxu0 0
  %315 = vmatprep.subr.bf16.mxu0 0
  %316 = vmatpush1.bf16.msra.mxu0 0
  %317 = vmatprep.mubr.bf16.mxu0 0
  %318 = vmatmul.mubr.bf16.gmra.mrb[0].mxu0 %v283
  %v319 = vpop.f32.mrb[0].mxu0
  %v320 = vadd.f32 %v269, %v319
  %v321 = vpop.f32.mrb[0].mxu0
  %v322 = vpop.f32.mrb[0].mxu0
  %v323 = vadd.f32 %v269, %v322
  %v324 = vpop.f32.mrb[0].mxu0
  %325 = vdwg.mxu0
  %v326 = vpack.c.bf16 %v323, %v320
  %328 = vrot.lane.b32.xlu0 %v326, 96
  %v329 = vpop.permute.xlu0 %328
  %vm330 = vcmask 130048
  %v332 = vsel %vm330, %v326, 0
  %v335 = vsel %vm330, %v329, 0
  %337 = vmatprep.subr.bf16.mxu0 0
  %338 = vmatpush1.bf16.xpose.msra.mxu0 %v335
  %339 = vmatprep.subr.bf16.mxu0 0
  %340 = vmatpush1.bf16.xpose.msra.mxu0 0
  %341 = vmatprep.subr.bf16.mxu0 0
  %342 = vmatpush1.bf16.xpose.msra.mxu0 0
  %343 = vmatprep.subr.bf16.mxu0 0
  %344 = vmatpush1.bf16.xpose.msra.mxu0 0
  %345 = vmatprep.subr.bf16.mxu0 0
  %346 = vmatpush1.bf16.xpose.msra.mxu0 0
  %347 = vmatprep.subr.bf16.mxu0 0
  %348 = vmatpush1.bf16.xpose.msra.mxu0 0
  %349 = vmatprep.subr.bf16.mxu0 0
  %350 = vmatpush1.bf16.xpose.msra.mxu0 0
  %351 = vmatprep.subr.bf16.mxu0 0
  %352 = vmatpush1.bf16.xpose.msra.mxu0 0
  %353 = vmatprep.subr.bf16.mxu0 0
  %354 = vmatpush1.bf16.xpose.msra.mxu0 0
  %355 = vmatprep.subr.bf16.mxu0 0
  %356 = vmatpush1.bf16.xpose.msra.mxu0 0
  %357 = vmatprep.subr.bf16.mxu0 0
  %358 = vmatpush1.bf16.xpose.msra.mxu0 0
  %359 = vmatprep.subr.bf16.mxu0 0
  %360 = vmatpush1.bf16.xpose.msra.mxu0 0
  %361 = vmatprep.subr.bf16.mxu0 0
  %362 = vmatpush1.bf16.xpose.msra.mxu0 0
  %363 = vmatprep.subr.bf16.mxu0 0
  %364 = vmatpush1.bf16.xpose.msra.mxu0 0
  %365 = vmatprep.subr.bf16.mxu0 0
  %366 = vmatpush1.bf16.xpose.msra.mxu0 0
  %367 = vmatprep.subr.bf16.mxu0 0
  %368 = vmatpush1.bf16.xpose.msra.mxu0 0
  %369 = vmatprep.mubr.bf16.mxu0 0
  %370 = vmatmul.mubr.bf16.gmra.mrb[0].mxu0 %v332
  %v371 = vpop.f32.mrb[0].mxu0
  %v372 = vadd.f32 0.0, %v371
  %v373 = vpop.f32.mrb[0].mxu0
  %v374 = vpop.f32.mrb[0].mxu0
  %v375 = vadd.f32 0.0, %v374
  %v376 = vpop.f32.mrb[0].mxu0
  %377 = vdwg.mxu0
  %v378 = vmul.f32 %v372, 0.25
  %v379 = vmul.f32 %v375, 0.25
  %v380 = vadd.f32 %v378, %v216
  %v381 = vadd.f32 %v379, %v217
  %vm382 = vcmask 80896
  %v383 = vsel %vm382, %v380, -inf
  %384 = vmax.xlane.f32.xlu0 %v383
  %v385 = vpop.xlane.xlu0 %384
  %vm386 = vcmask 74752
  %v387 = vsel %vm386, %v381, -inf
  %388 = vmax.xlane.f32.xlu0 %v387
  %v389 = vpop.xlane.xlu0 %388
  %v390 = vsub.f32 %v380, %v385
  %v391 = vsub.f32 %v381, %v389
  %v392 = vmul.f32 %v390, 1.442695
  %v393 = vpow.pop %v392
  %v394 = vmul.f32 %v391, 1.442695
  %v395 = vpow.pop %v394
  %v396 = vsel %vm382, %v393, 0.0
  %397 = vadd.xlane.f32.xlu0 %v396
  %v398 = vpop.xlane.xlu0 %397
  %v399 = vsel %vm386, %v395, 0.0
  %400 = vadd.xlane.f32.xlu0 %v399
  %v401 = vpop.xlane.xlu0 %400
  %v402 = vrcp.pop %v398
  %v403 = vrcp.pop %v401
  %v404 = vmul.f32 %v393, %v402
  %v405 = vmul.f32 %v395, %v403
  %v406 = vpack.c.bf16 %v405, %v404
  %407 = vrot.lane.b32.xlu0 %v326, 64
  %v408 = vpop.permute.xlu0 %407
  %v410 = vsel %vm382, %v406, 0
  %vm412 = vcmask 1044480
  %v414 = vsel %vm412, %v408, 0
  %416 = vmatprep.subr.bf16.mxu0 0
  %417 = vmatpush1.bf16.msra.mxu0 %v414
  %418 = vmatprep.subr.bf16.mxu0 0
  %419 = vmatpush1.bf16.msra.mxu0 0
  %420 = vmatprep.subr.bf16.mxu0 0
  %421 = vmatpush1.bf16.msra.mxu0 0
  %422 = vmatprep.subr.bf16.mxu0 0
  %423 = vmatpush1.bf16.msra.mxu0 0
  %424 = vmatprep.subr.bf16.mxu0 0
  %425 = vmatpush1.bf16.msra.mxu0 0
  %426 = vmatprep.subr.bf16.mxu0 0
  %427 = vmatpush1.bf16.msra.mxu0 0
  %428 = vmatprep.subr.bf16.mxu0 0
  %429 = vmatpush1.bf16.msra.mxu0 0
  %430 = vmatprep.subr.bf16.mxu0 0
  %431 = vmatpush1.bf16.msra.mxu0 0
  %432 = vmatprep.subr.bf16.mxu0 0
  %433 = vmatpush1.bf16.msra.mxu0 0
  %434 = vmatprep.subr.bf16.mxu0 0
  %435 = vmatpush1.bf16.msra.mxu0 0
  %436 = vmatprep.subr.bf16.mxu0 0
  %437 = vmatpush1.bf16.msra.mxu0 0
  %438 = vmatprep.subr.bf16.mxu0 0
  %439 = vmatpush1.bf16.msra.mxu0 0
  %440 = vmatprep.subr.bf16.mxu0 0
  %441 = vmatpush1.bf16.msra.mxu0 0
  %442 = vmatprep.subr.bf16.mxu0 0
  %443 = vmatpush1.bf16.msra.mxu0 0
  %444 = vmatprep.subr.bf16.mxu0 0
  %445 = vmatpush1.bf16.msra.mxu0 0
  %446 = vmatprep.subr.bf16.mxu0 0
  %447 = vmatpush1.bf16.msra.mxu0 0
  %448 = vmatprep.mubr.bf16.mxu0 0
  %449 = vmatmul.mubr.bf16.gmra.mrb[0].mxu0 %v410
  %v450 = vpop.f32.mrb[0].mxu0
  %v451 = vadd.f32 0.0, %v450
  %v452 = vpop.f32.mrb[0].mxu0
  %v453 = vpop.f32.mrb[0].mxu0
  %v454 = vadd.f32 0.0, %v453
  %v455 = vpop.f32.mrb[0].mxu0
  %456 = vdwg.mxu0
  %457 = vrot.lane.b32.xlu0 %v326, 112
  %v458 = vpop.permute.xlu0 %457
  %459 = vrot.lane.b32.xlu0 %v326, 80
  %v460 = vpop.permute.xlu0 %459
  %v462 = vsel %vm330, %v458, 0
  %v465 = vsel %vm330, %v460, 0
  %467 = vmatprep.subr.bf16.mxu0 0
  %468 = vmatpush1.bf16.xpose.msra.mxu0 %v465
  %469 = vmatprep.subr.bf16.mxu0 0
  %470 = vmatpush1.bf16.xpose.msra.mxu0 0
  %471 = vmatprep.subr.bf16.mxu0 0
  %472 = vmatpush1.bf16.xpose.msra.mxu0 0
  %473 = vmatprep.subr.bf16.mxu0 0
  %474 = vmatpush1.bf16.xpose.msra.mxu0 0
  %475 = vmatprep.subr.bf16.mxu0 0
  %476 = vmatpush1.bf16.xpose.msra.mxu0 0
  %477 = vmatprep.subr.bf16.mxu0 0
  %478 = vmatpush1.bf16.xpose.msra.mxu0 0
  %479 = vmatprep.subr.bf16.mxu0 0
  %480 = vmatpush1.bf16.xpose.msra.mxu0 0
  %481 = vmatprep.subr.bf16.mxu0 0
  %482 = vmatpush1.bf16.xpose.msra.mxu0 0
  %483 = vmatprep.subr.bf16.mxu0 0
  %484 = vmatpush1.bf16.xpose.msra.mxu0 0
  %485 = vmatprep.subr.bf16.mxu0 0
  %486 = vmatpush1.bf16.xpose.msra.mxu0 0
  %487 = vmatprep.subr.bf16.mxu0 0
  %488 = vmatpush1.bf16.xpose.msra.mxu0 0
  %489 = vmatprep.subr.bf16.mxu0 0
  %490 = vmatpush1.bf16.xpose.msra.mxu0 0
  %491 = vmatprep.subr.bf16.mxu0 0
  %492 = vmatpush1.bf16.xpose.msra.mxu0 0
  %493 = vmatprep.subr.bf16.mxu0 0
  %494 = vmatpush1.bf16.xpose.msra.mxu0 0
  %495 = vmatprep.subr.bf16.mxu0 0
  %496 = vmatpush1.bf16.xpose.msra.mxu0 0
  %497 = vmatprep.subr.bf16.mxu0 0
  %498 = vmatpush1.bf16.xpose.msra.mxu0 0
  %499 = vmatprep.mubr.bf16.mxu0 0
  %500 = vmatmul.mubr.bf16.gmra.mrb[0].mxu0 %v462
  %v501 = vpop.f32.mrb[0].mxu0
  %v502 = vadd.f32 0.0, %v501
  %v503 = vpop.f32.mrb[0].mxu0
  %v504 = vpop.f32.mrb[0].mxu0
  %v505 = vadd.f32 0.0, %v504
  %v506 = vpop.f32.mrb[0].mxu0
  %507 = vdwg.mxu0
  %v508 = vmul.f32 %v502, 0.25
  %v509 = vmul.f32 %v505, 0.25
  %v510 = vadd.f32 %v508, %v216
  %v511 = vadd.f32 %v509, %v217
  %v512 = vsel %vm382, %v510, -inf
  %513 = vmax.xlane.f32.xlu0 %v512
  %v514 = vpop.xlane.xlu0 %513
  %v515 = vsel %vm386, %v511, -inf
  %516 = vmax.xlane.f32.xlu0 %v515
  %v517 = vpop.xlane.xlu0 %516
  %v518 = vsub.f32 %v510, %v514
  %v519 = vsub.f32 %v511, %v517
  %v520 = vmul.f32 %v518, 1.442695
  %v521 = vpow.pop %v520
  %v522 = vmul.f32 %v519, 1.442695
  %v523 = vpow.pop %v522
  %v524 = vsel %vm382, %v521, 0.0
  %525 = vadd.xlane.f32.xlu0 %v524
  %v526 = vpop.xlane.xlu0 %525
  %v527 = vsel %vm386, %v523, 0.0
  %528 = vadd.xlane.f32.xlu0 %v527
  %v529 = vpop.xlane.xlu0 %528
  %v530 = vrcp.pop %v526
  %v531 = vrcp.pop %v529
  %v532 = vmul.f32 %v521, %v530
  %v533 = vmul.f32 %v523, %v531
  %v534 = vpack.c.bf16 %v533, %v532
  %535 = vrot.lane.b32.xlu0 %v326, 48
  %v536 = vpop.permute.xlu0 %535
  %v538 = vsel %vm382, %v534, 0
  %v541 = vsel %vm412, %v536, 0
  %543 = vmatprep.subr.bf16.mxu0 0
  %544 = vmatpush1.bf16.msra.mxu0 %v541
  %545 = vmatprep.subr.bf16.mxu0 0
  %546 = vmatpush1.bf16.msra.mxu0 0
  %547 = vmatprep.subr.bf16.mxu0 0
  %548 = vmatpush1.bf16.msra.mxu0 0
  %549 = vmatprep.subr.bf16.mxu0 0
  %550 = vmatpush1.bf16.msra.mxu0 0
  %551 = vmatprep.subr.bf16.mxu0 0
  %552 = vmatpush1.bf16.msra.mxu0 0
  %553 = vmatprep.subr.bf16.mxu0 0
  %554 = vmatpush1.bf16.msra.mxu0 0
  %555 = vmatprep.subr.bf16.mxu0 0
  %556 = vmatpush1.bf16.msra.mxu0 0
  %557 = vmatprep.subr.bf16.mxu0 0
  %558 = vmatpush1.bf16.msra.mxu0 0
  %559 = vmatprep.subr.bf16.mxu0 0
  %560 = vmatpush1.bf16.msra.mxu0 0
  %561 = vmatprep.subr.bf16.mxu0 0
  %562 = vmatpush1.bf16.msra.mxu0 0
  %563 = vmatprep.subr.bf16.mxu0 0
  %564 = vmatpush1.bf16.msra.mxu0 0
  %565 = vmatprep.subr.bf16.mxu0 0
  %566 = vmatpush1.bf16.msra.mxu0 0
  %567 = vmatprep.subr.bf16.mxu0 0
  %568 = vmatpush1.bf16.msra.mxu0 0
  %569 = vmatprep.subr.bf16.mxu0 0
  %570 = vmatpush1.bf16.msra.mxu0 0
  %571 = vmatprep.subr.bf16.mxu0 0
  %572 = vmatpush1.bf16.msra.mxu0 0
  %573 = vmatprep.subr.bf16.mxu0 0
  %574 = vmatpush1.bf16.msra.mxu0 0
  %575 = vmatprep.mubr.bf16.mxu0 0
  %576 = vmatmul.mubr.bf16.gmra.mrb[0].mxu0 %v538
  %v577 = vpop.f32.mrb[0].mxu0
  %v578 = vadd.f32 0.0, %v577
  %v579 = vpop.f32.mrb[0].mxu0
  %v580 = vpop.f32.mrb[0].mxu0
  %v581 = vadd.f32 0.0, %v580
  %v582 = vpop.f32.mrb[0].mxu0
  %583 = vdwg.mxu0
  %586 = vrot.lane.b32.xlu0 %v578, 16
  %v587 = vpop.permute.xlu0 %586
  %588 = vrot.lane.b32.xlu0 %v581, 16
  %v589 = vpop.permute.xlu0 %588
  %v592 = vsel %vm330, %v451, %v587
  %v593 = vsel %vm330, %v454, %v589
  %v594 = vpack.c.bf16 %v593, %v592
  %v595 = vld [vmem:[%s6] sm:$0xf]
  %v596 = vld [vmem:[%s6 + $0x4] sm:$0xf]
  %v597 = vld [vmem:[%s6 + $0x8] sm:$0xf]
  %v598 = vld [vmem:[%s6 + $0xc] sm:$0xf]
  %v599 = vlaneseq
  %v600 = vshrl.u32 %v599, 7
  %v601 = vsub.s32 3, %v600
  %v602 = vrot.slane %v218, %v601
  %v607 = vunpack.c.l.b16 %v595
  %v608 = vunpack.c.l.b16 %v596
  %v609 = vunpack.c.l.b16 %v597
  %v610 = vunpack.c.l.b16 %v598
  %v611 = vpack.c.b16 %v608, %v607
  %v612 = vpack.c.b16 %v610, %v609
  %v616 = vsel %vm220, %v594, 0
  %618 = vmatprep.subr.bf16.mxu0 0
  %619 = vmatpush1.bf16.msra.mxu0 %v611
  %620 = vmatprep.subr.bf16.mxu0 0
  %621 = vmatpush1.bf16.msra.mxu0 %v612
  %622 = vmatprep.subr.bf16.mxu0 0
  %623 = vmatpush1.bf16.msra.mxu0 0
  %624 = vmatprep.subr.bf16.mxu0 0
  %625 = vmatpush1.bf16.msra.mxu0 0
  %626 = vmatprep.subr.bf16.mxu0 0
  %627 = vmatpush1.bf16.msra.mxu0 0
  %628 = vmatprep.subr.bf16.mxu0 0
  %629 = vmatpush1.bf16.msra.mxu0 0
  %630 = vmatprep.subr.bf16.mxu0 0
  %631 = vmatpush1.bf16.msra.mxu0 0
  %632 = vmatprep.subr.bf16.mxu0 0
  %633 = vmatpush1.bf16.msra.mxu0 0
  %634 = vmatprep.subr.bf16.mxu0 0
  %635 = vmatpush1.bf16.msra.mxu0 0
  %636 = vmatprep.subr.bf16.mxu0 0
  %637 = vmatpush1.bf16.msra.mxu0 0
  %638 = vmatprep.subr.bf16.mxu0 0
  %639 = vmatpush1.bf16.msra.mxu0 0
  %640 = vmatprep.subr.bf16.mxu0 0
  %641 = vmatpush1.bf16.msra.mxu0 0
  %642 = vmatprep.subr.bf16.mxu0 0
  %643 = vmatpush1.bf16.msra.mxu0 0
  %644 = vmatprep.subr.bf16.mxu0 0
  %645 = vmatpush1.bf16.msra.mxu0 0
  %646 = vmatprep.subr.bf16.mxu0 0
  %647 = vmatpush1.bf16.msra.mxu0 0
  %648 = vmatprep.subr.bf16.mxu0 0
  %649 = vmatpush1.bf16.msra.mxu0 0
  %650 = vmatprep.mubr.bf16.mxu0 0
  %651 = vmatmul.mubr.bf16.gmra.mrb[0].mxu0 %v616
  %v652 = vpop.f32.mrb[0].mxu0
  %v653 = vadd.f32 %v602, %v652
  %v654 = vpop.f32.mrb[0].mxu0
  %v655 = vpop.f32.mrb[0].mxu0
  %v656 = vadd.f32 %v602, %v655
  %v657 = vpop.f32.mrb[0].mxu0
  %658 = vdwg.mxu0
  %v659 = vlaneseq
  %v660 = vshrl.u32 %v659, 7
  %v661 = vsub.s32 4, %v660
  %v662 = vrot.slane %v218, %v661
  %v663 = vmul.f32 %v662, %v653
  %v664 = vmul.f32 %v662, %v656
  %v665 = vadd.f32 %v210, %v663
  %v666 = vadd.f32 %v213, %v664
  %v667 = vsel %vm220, %v665, 0.0
  %668 = vadd.xlane.f32.xlu0 %v667
  %v669 = vpop.xlane.xlu0 %668
  %v670 = vsel %vm224, %v666, 0.0
  %671 = vadd.xlane.f32.xlu0 %v670
  %v672 = vpop.xlane.xlu0 %671
  %v673 = vmul.f32 %v669, %v228
  %v674 = vmul.f32 %v672, %v228
  %v675 = vsub.f32 %v665, %v673
  %v676 = vsub.f32 %v666, %v674
  %v677 = vmul.f32 %v675, %v675
  %v678 = vmul.f32 %v676, %v676
  %v679 = vsel %vm220, %v677, 0.0
  %680 = vadd.xlane.f32.xlu0 %v679
  %v681 = vpop.xlane.xlu0 %680
  %v682 = vsel %vm224, %v678, 0.0
  %683 = vadd.xlane.f32.xlu0 %v682
  %v684 = vpop.xlane.xlu0 %683
  %v685 = vmul.f32 %v681, %v228
  %v686 = vmul.f32 %v684, %v228
  %v687 = vadd.f32 %v685, 1e-06
  %v688 = vadd.f32 %v686, 1e-06
  %v689 = vrsqrt.pop %v687
  %v690 = vrsqrt.pop %v688
  %v691 = vmul.f32 %v675, %v689
  %v692 = vmul.f32 %v676, %v690
  %v693 = vlaneseq
  %v694 = vshrl.u32 %v693, 7
  %v695 = vsub.s32 5, %v694
  %v696 = vrot.slane %v218, %v695
  %v697 = vmul.f32 %v691, %v696
  %v698 = vmul.f32 %v692, %v696
  %v699 = vlaneseq
  %v700 = vshrl.u32 %v699, 7
  %v701 = vsub.s32 6, %v700
  %v702 = vrot.slane %v218, %v701
  %v703 = vadd.f32 %v697, %v702
  %v704 = vadd.f32 %v698, %v702
  %v705 = vpack.c.bf16 %v704, %v703
  %v706 = vld [vmem:[%s7] sm:$0xf]
  %v707 = vld [vmem:[%s7 + $0x4] sm:$0xf]
  %v708 = vld [vmem:[%s7 + $0x8] sm:$0xf]
  %v709 = vld [vmem:[%s7 + $0xc] sm:$0xf]
  %v710 = vlaneseq
  %v711 = vshrl.u32 %v710, 7
  %v712 = vsub.s32 7, %v711
  %v713 = vrot.slane %v218, %v712
  %v718 = vunpack.c.l.b16 %v706
  %v719 = vunpack.c.l.b16 %v707
  %v720 = vunpack.c.l.b16 %v708
  %v721 = vunpack.c.l.b16 %v709
  %v722 = vpack.c.b16 %v719, %v718
  %v723 = vpack.c.b16 %v721, %v720
  %v727 = vsel %vm220, %v705, 0
  %729 = vmatprep.subr.bf16.mxu0 0
  %730 = vmatpush1.bf16.msra.mxu0 %v722
  %731 = vmatprep.subr.bf16.mxu0 0
  %732 = vmatpush1.bf16.msra.mxu0 %v723
  %733 = vmatprep.subr.bf16.mxu0 0
  %734 = vmatpush1.bf16.msra.mxu0 0
  %735 = vmatprep.subr.bf16.mxu0 0
  %736 = vmatpush1.bf16.msra.mxu0 0
  %737 = vmatprep.subr.bf16.mxu0 0
  %738 = vmatpush1.bf16.msra.mxu0 0
  %739 = vmatprep.subr.bf16.mxu0 0
  %740 = vmatpush1.bf16.msra.mxu0 0
  %741 = vmatprep.subr.bf16.mxu0 0
  %742 = vmatpush1.bf16.msra.mxu0 0
  %743 = vmatprep.subr.bf16.mxu0 0
  %744 = vmatpush1.bf16.msra.mxu0 0
  %745 = vmatprep.subr.bf16.mxu0 0
  %746 = vmatpush1.bf16.msra.mxu0 0
  %747 = vmatprep.subr.bf16.mxu0 0
  %748 = vmatpush1.bf16.msra.mxu0 0
  %749 = vmatprep.subr.bf16.mxu0 0
  %750 = vmatpush1.bf16.msra.mxu0 0
  %751 = vmatprep.subr.bf16.mxu0 0
  %752 = vmatpush1.bf16.msra.mxu0 0
  %753 = vmatprep.subr.bf16.mxu0 0
  %754 = vmatpush1.bf16.msra.mxu0 0
  %755 = vmatprep.subr.bf16.mxu0 0
  %756 = vmatpush1.bf16.msra.mxu0 0
  %757 = vmatprep.subr.bf16.mxu0 0
  %758 = vmatpush1.bf16.msra.mxu0 0
  %759 = vmatprep.subr.bf16.mxu0 0
  %760 = vmatpush1.bf16.msra.mxu0 0
  %761 = vmatprep.mubr.bf16.mxu0 0
  %762 = vmatmul.mubr.bf16.gmra.mrb[0].mxu0 %v727
  %v763 = vpop.f32.mrb[0].mxu0
  %v764 = vadd.f32 %v713, %v763
  %v765 = vpop.f32.mrb[0].mxu0
  %v766 = vpop.f32.mrb[0].mxu0
  %v767 = vadd.f32 %v713, %v766
  %v768 = vpop.f32.mrb[0].mxu0
  %769 = vdwg.mxu0
  %v770 = vmul.f32 %v764, 0.5
  %v771 = vmul.f32 %v767, 0.5
  %v772 = vmul.f32 %v764, 0.70710677
  %v773 = vmul.f32 %v767, 0.70710677
  %v774 = vand.u32 2147483647, %v772
  %v775 = vand.u32 2147483647, %v773
  %v776 = vmul.f32 %v774, 0.3275911
  %v777 = vmul.f32 %v775, 0.3275911
  %v778 = vadd.f32 %v776, 1.0
  %v779 = vadd.f32 %v777, 1.0
  %v780 = vrcp.pop %v778
  %v781 = vmul.f32 1.0, %v780
  %v782 = vrcp.pop %v779
  %v783 = vmul.f32 1.0, %v782
  %v784 = vmul.f32 %v781, 1.0614054
  %v785 = vmul.f32 %v783, 1.0614054
  %v786 = vadd.f32 %v784, -1.4531521
  %v787 = vadd.f32 %v785, -1.4531521
  %v788 = vmul.f32 %v786, %v781
  %v789 = vmul.f32 %v787, %v783
  %v790 = vadd.f32 %v788, 1.4214138
  %v791 = vadd.f32 %v789, 1.4214138
  %v792 = vmul.f32 %v790, %v781
  %v793 = vmul.f32 %v791, %v783
  %v794 = vadd.f32 %v792, -0.28449672
  %v795 = vadd.f32 %v793, -0.28449672
  %v796 = vmul.f32 %v794, %v781
  %v797 = vmul.f32 %v795, %v783
  %v798 = vadd.f32 %v796, 0.2548296
  %v799 = vadd.f32 %v797, 0.2548296
  %v800 = vmul.f32 %v798, %v781
  %v801 = vmul.f32 %v799, %v783
  %v802 = vmul.f32 %v772, %v772
  %v803 = vmul.f32 %v773, %v773
  %v804 = vsub.f32 0.0, %v802
  %v805 = vsub.f32 0.0, %v803
  %v806 = vmul.f32 %v804, 1.442695
  %v807 = vpow.pop %v806
  %v808 = vmul.f32 %v805, 1.442695
  %v809 = vpow.pop %v808
  %v810 = vmul.f32 %v800, %v807
  %v811 = vmul.f32 %v801, %v809
  %v812 = vsub.f32 1.0, %v810
  %v813 = vsub.f32 1.0, %v811
  %vm814 = vcmp.ge.f32.partialorder %v772, 0.0
  %vm815 = vcmp.ge.f32.partialorder %v773, 0.0
  %v816 = vsub.f32 0.0, %v812
  %v817 = vsub.f32 0.0, %v813
  %v818 = vsel %vm814, %v812, %v816
  %v819 = vsel %vm815, %v813, %v817
  %v820 = vadd.f32 %v818, 1.0
  %v821 = vadd.f32 %v819, 1.0
  %v822 = vmul.f32 %v770, %v820
  %v823 = vmul.f32 %v771, %v821
  %v824 = vpack.c.bf16 %v823, %v822
  %v825 = vld [vmem:[%s8] sm:$0xf]
  %v826 = vld [vmem:[%s8 + $0x4] sm:$0xf]
  %v827 = vld [vmem:[%s8 + $0x8] sm:$0xf]
  %v828 = vld [vmem:[%s8 + $0xc] sm:$0xf]
  %v829 = vld [vmem:[%s8 + $0x10] sm:$0xf]
  %v830 = vld [vmem:[%s8 + $0x14] sm:$0xf]
  %v831 = vld [vmem:[%s8 + $0x18] sm:$0xf]
  %v832 = vld [vmem:[%s8 + $0x1c] sm:$0xf]
  %v833 = vld [vmem:[%s8 + $0x20] sm:$0xf]
  %v834 = vld [vmem:[%s8 + $0x24] sm:$0xf]
  %v835 = vld [vmem:[%s8 + $0x28] sm:$0xf]
  %v836 = vld [vmem:[%s8 + $0x2c] sm:$0xf]
  %v837 = vld [vmem:[%s8 + $0x30] sm:$0xf]
  %v838 = vld [vmem:[%s8 + $0x34] sm:$0xf]
  %v839 = vld [vmem:[%s8 + $0x38] sm:$0xf]
  %v840 = vld [vmem:[%s8 + $0x3c] sm:$0xf]
  %v841 = vlaneseq
  %v842 = vshrl.u32 %v841, 7
  %v843 = vsub.s32 0, %v842
  %v844 = vrot.slane %v219, %v843
  %v861 = vunpack.c.l.b16 %v825
  %v862 = vunpack.c.l.b16 %v826
  %v863 = vunpack.c.l.b16 %v827
  %v864 = vunpack.c.l.b16 %v828
  %v865 = vunpack.c.l.b16 %v829
  %v866 = vunpack.c.l.b16 %v830
  %v867 = vunpack.c.l.b16 %v831
  %v868 = vunpack.c.l.b16 %v832
  %v869 = vunpack.c.l.b16 %v833
  %v870 = vunpack.c.l.b16 %v834
  %v871 = vunpack.c.l.b16 %v835
  %v872 = vunpack.c.l.b16 %v836
  %v873 = vunpack.c.l.b16 %v837
  %v874 = vunpack.c.l.b16 %v838
  %v875 = vunpack.c.l.b16 %v839
  %v876 = vunpack.c.l.b16 %v840
  %v877 = vpack.c.b16 %v862, %v861
  %v878 = vpack.c.b16 %v864, %v863
  %v879 = vpack.c.b16 %v866, %v865
  %v880 = vpack.c.b16 %v868, %v867
  %v881 = vpack.c.b16 %v870, %v869
  %v882 = vpack.c.b16 %v872, %v871
  %v883 = vpack.c.b16 %v874, %v873
  %v884 = vpack.c.b16 %v876, %v875
  %893 = vmatprep.subr.bf16.mxu0 0
  %894 = vmatpush1.bf16.msra.mxu0 %v877
  %895 = vmatprep.subr.bf16.mxu0 0
  %896 = vmatpush1.bf16.msra.mxu0 %v878
  %897 = vmatprep.subr.bf16.mxu0 0
  %898 = vmatpush1.bf16.msra.mxu0 %v879
  %899 = vmatprep.subr.bf16.mxu0 0
  %900 = vmatpush1.bf16.msra.mxu0 %v880
  %901 = vmatprep.subr.bf16.mxu0 0
  %902 = vmatpush1.bf16.msra.mxu0 %v881
  %903 = vmatprep.subr.bf16.mxu0 0
  %904 = vmatpush1.bf16.msra.mxu0 %v882
  %905 = vmatprep.subr.bf16.mxu0 0
  %906 = vmatpush1.bf16.msra.mxu0 %v883
  %907 = vmatprep.subr.bf16.mxu0 0
  %908 = vmatpush1.bf16.msra.mxu0 %v884
  %909 = vmatprep.subr.bf16.mxu0 0
  %910 = vmatpush1.bf16.msra.mxu0 0
  %911 = vmatprep.subr.bf16.mxu0 0
  %912 = vmatpush1.bf16.msra.mxu0 0
  %913 = vmatprep.subr.bf16.mxu0 0
  %914 = vmatpush1.bf16.msra.mxu0 0
  %915 = vmatprep.subr.bf16.mxu0 0
  %916 = vmatpush1.bf16.msra.mxu0 0
  %917 = vmatprep.subr.bf16.mxu0 0
  %918 = vmatpush1.bf16.msra.mxu0 0
  %919 = vmatprep.subr.bf16.mxu0 0
  %920 = vmatpush1.bf16.msra.mxu0 0
  %921 = vmatprep.subr.bf16.mxu0 0
  %922 = vmatpush1.bf16.msra.mxu0 0
  %923 = vmatprep.subr.bf16.mxu0 0
  %924 = vmatpush1.bf16.msra.mxu0 0
  %925 = vmatprep.mubr.bf16.mxu0 0
  %926 = vmatmul.mubr.bf16.gmra.mrb[0].mxu0 %v824
  %v927 = vpop.f32.mrb[0].mxu0
  %v928 = vadd.f32 %v844, %v927
  %v929 = vpop.f32.mrb[0].mxu0
  %v930 = vpop.f32.mrb[0].mxu0
  %v931 = vadd.f32 %v844, %v930
  %v932 = vpop.f32.mrb[0].mxu0
  %933 = vdwg.mxu0
  %v934 = vlaneseq
  %v935 = vshrl.u32 %v934, 7
  %v936 = vsub.s32 1, %v935
  %v937 = vrot.slane %v219, %v936
  %v938 = vmul.f32 %v937, %v928
  %v939 = vmul.f32 %v937, %v931
  %v940 = vadd.f32 %v665, %v938
  %v941 = vadd.f32 %v666, %v939
  %s942 = scalar_lea.vmem %s9, 16
  %v943 = vld [vmem:[%s942] sm:$0xff]
  %v944 = vld [vmem:[%s942 + $0x8] sm:$0x3]
  %v945 = vsel %vm220, %v940, 0.0
  %946 = vadd.xlane.f32.xlu0 %v945
  %v947 = vpop.xlane.xlu0 %946
  %v948 = vsel %vm224, %v941, 0.0
  %949 = vadd.xlane.f32.xlu0 %v948
  %v950 = vpop.xlane.xlu0 %949
  %v951 = vmul.f32 %v947, %v228
  %v952 = vmul.f32 %v950, %v228
  %v953 = vsub.f32 %v940, %v951
  %v954 = vsub.f32 %v941, %v952
  %v955 = vmul.f32 %v953, %v953
  %v956 = vmul.f32 %v954, %v954
  %v957 = vsel %vm220, %v955, 0.0
  %958 = vadd.xlane.f32.xlu0 %v957
  %v959 = vpop.xlane.xlu0 %958
  %v960 = vsel %vm224, %v956, 0.0
  %961 = vadd.xlane.f32.xlu0 %v960
  %v962 = vpop.xlane.xlu0 %961
  %v963 = vmul.f32 %v959, %v228
  %v964 = vmul.f32 %v962, %v228
  %v965 = vadd.f32 %v963, 1e-06
  %v966 = vadd.f32 %v964, 1e-06
  %v967 = vrsqrt.pop %v965
  %v968 = vrsqrt.pop %v966
  %v969 = vmul.f32 %v953, %v967
  %v970 = vmul.f32 %v954, %v968
  %v971 = vlaneseq
  %v972 = vshrl.u32 %v971, 7
  %v973 = vsub.s32 0, %v972
  %v974 = vrot.slane %v943, %v973
  %v975 = vmul.f32 %v969, %v974
  %v976 = vmul.f32 %v970, %v974
  %v977 = vlaneseq
  %v978 = vshrl.u32 %v977, 7
  %v979 = vsub.s32 1, %v978
  %v980 = vrot.slane %v943, %v979
  %v981 = vadd.f32 %v975, %v980
  %v982 = vadd.f32 %v976, %v980
  %v983 = vpack.c.bf16 %v982, %v981
  %s984 = scalar_lea.vmem %s5, 16
  %v985 = vld [vmem:[%s984] sm:$0xf]
  %v986 = vld [vmem:[%s984 + $0x4] sm:$0xf]
  %v987 = vld [vmem:[%s984 + $0x8] sm:$0xf]
  %v988 = vld [vmem:[%s984 + $0xc] sm:$0xf]
  %v989 = vlaneseq
  %v990 = vshrl.u32 %v989, 7
  %v991 = vsub.s32 2, %v990
  %v992 = vrot.slane %v943, %v991
  %v997 = vunpack.c.l.b16 %v985
  %v998 = vunpack.c.l.b16 %v986
  %v999 = vunpack.c.l.b16 %v987
  %v1000 = vunpack.c.l.b16 %v988
  %v1001 = vpack.c.b16 %v998, %v997
  %v1002 = vpack.c.b16 %v1000, %v999
  %v1006 = vsel %vm220, %v983, 0
  %1008 = vmatprep.subr.bf16.mxu0 0
  %1009 = vmatpush1.bf16.msra.mxu0 %v1001
  %1010 = vmatprep.subr.bf16.mxu0 0
  %1011 = vmatpush1.bf16.msra.mxu0 %v1002
  %1012 = vmatprep.subr.bf16.mxu0 0
  %1013 = vmatpush1.bf16.msra.mxu0 0
  %1014 = vmatprep.subr.bf16.mxu0 0
  %1015 = vmatpush1.bf16.msra.mxu0 0
  %1016 = vmatprep.subr.bf16.mxu0 0
  %1017 = vmatpush1.bf16.msra.mxu0 0
  %1018 = vmatprep.subr.bf16.mxu0 0
  %1019 = vmatpush1.bf16.msra.mxu0 0
  %1020 = vmatprep.subr.bf16.mxu0 0
  %1021 = vmatpush1.bf16.msra.mxu0 0
  %1022 = vmatprep.subr.bf16.mxu0 0
  %1023 = vmatpush1.bf16.msra.mxu0 0
  %1024 = vmatprep.subr.bf16.mxu0 0
  %1025 = vmatpush1.bf16.msra.mxu0 0
  %1026 = vmatprep.subr.bf16.mxu0 0
  %1027 = vmatpush1.bf16.msra.mxu0 0
  %1028 = vmatprep.subr.bf16.mxu0 0
  %1029 = vmatpush1.bf16.msra.mxu0 0
  %1030 = vmatprep.subr.bf16.mxu0 0
  %1031 = vmatpush1.bf16.msra.mxu0 0
  %1032 = vmatprep.subr.bf16.mxu0 0
  %1033 = vmatpush1.bf16.msra.mxu0 0
  %1034 = vmatprep.subr.bf16.mxu0 0
  %1035 = vmatpush1.bf16.msra.mxu0 0
  %1036 = vmatprep.subr.bf16.mxu0 0
  %1037 = vmatpush1.bf16.msra.mxu0 0
  %1038 = vmatprep.subr.bf16.mxu0 0
  %1039 = vmatpush1.bf16.msra.mxu0 0
  %1040 = vmatprep.mubr.bf16.mxu0 0
  %1041 = vmatmul.mubr.bf16.gmra.mrb[0].mxu0 %v1006
  %v1042 = vpop.f32.mrb[0].mxu0
  %v1043 = vadd.f32 %v992, %v1042
  %v1044 = vpop.f32.mrb[0].mxu0
  %v1045 = vpop.f32.mrb[0].mxu0
  %v1046 = vadd.f32 %v992, %v1045
  %v1047 = vpop.f32.mrb[0].mxu0
  %1048 = vdwg.mxu0
  %v1049 = vpack.c.bf16 %v1046, %v1043
  %1051 = vrot.lane.b32.xlu0 %v1049, 96
  %v1052 = vpop.permute.xlu0 %1051
  %v1054 = vsel %vm330, %v1049, 0
  %v1057 = vsel %vm330, %v1052, 0
  %1059 = vmatprep.subr.bf16.mxu0 0
  %1060 = vmatpush1.bf16.xpose.msra.mxu0 %v1057
  %1061 = vmatprep.subr.bf16.mxu0 0
  %1062 = vmatpush1.bf16.xpose.msra.mxu0 0
  %1063 = vmatprep.subr.bf16.mxu0 0
  %1064 = vmatpush1.bf16.xpose.msra.mxu0 0
  %1065 = vmatprep.subr.bf16.mxu0 0
  %1066 = vmatpush1.bf16.xpose.msra.mxu0 0
  %1067 = vmatprep.subr.bf16.mxu0 0
  %1068 = vmatpush1.bf16.xpose.msra.mxu0 0
  %1069 = vmatprep.subr.bf16.mxu0 0
  %1070 = vmatpush1.bf16.xpose.msra.mxu0 0
  %1071 = vmatprep.subr.bf16.mxu0 0
  %1072 = vmatpush1.bf16.xpose.msra.mxu0 0
  %1073 = vmatprep.subr.bf16.mxu0 0
  %1074 = vmatpush1.bf16.xpose.msra.mxu0 0
  %1075 = vmatprep.subr.bf16.mxu0 0
  %1076 = vmatpush1.bf16.xpose.msra.mxu0 0
  %1077 = vmatprep.subr.bf16.mxu0 0
  %1078 = vmatpush1.bf16.xpose.msra.mxu0 0
  %1079 = vmatprep.subr.bf16.mxu0 0
  %1080 = vmatpush1.bf16.xpose.msra.mxu0 0
  %1081 = vmatprep.subr.bf16.mxu0 0
  %1082 = vmatpush1.bf16.xpose.msra.mxu0 0
  %1083 = vmatprep.subr.bf16.mxu0 0
  %1084 = vmatpush1.bf16.xpose.msra.mxu0 0
  %1085 = vmatprep.subr.bf16.mxu0 0
  %1086 = vmatpush1.bf16.xpose.msra.mxu0 0
  %1087 = vmatprep.subr.bf16.mxu0 0
  %1088 = vmatpush1.bf16.xpose.msra.mxu0 0
  %1089 = vmatprep.subr.bf16.mxu0 0
  %1090 = vmatpush1.bf16.xpose.msra.mxu0 0
  %1091 = vmatprep.mubr.bf16.mxu0 0
  %1092 = vmatmul.mubr.bf16.gmra.mrb[0].mxu0 %v1054
  %v1093 = vpop.f32.mrb[0].mxu0
  %v1094 = vadd.f32 0.0, %v1093
  %v1095 = vpop.f32.mrb[0].mxu0
  %v1096 = vpop.f32.mrb[0].mxu0
  %v1097 = vadd.f32 0.0, %v1096
  %v1098 = vpop.f32.mrb[0].mxu0
  %1099 = vdwg.mxu0
  %v1100 = vmul.f32 %v1094, 0.25
  %v1101 = vmul.f32 %v1097, 0.25
  %v1102 = vadd.f32 %v1100, %v216
  %v1103 = vadd.f32 %v1101, %v217
  %v1104 = vsel %vm382, %v1102, -inf
  %1105 = vmax.xlane.f32.xlu0 %v1104
  %v1106 = vpop.xlane.xlu0 %1105
  %v1107 = vsel %vm386, %v1103, -inf
  %1108 = vmax.xlane.f32.xlu0 %v1107
  %v1109 = vpop.xlane.xlu0 %1108
  %v1110 = vsub.f32 %v1102, %v1106
  %v1111 = vsub.f32 %v1103, %v1109
  %v1112 = vmul.f32 %v1110, 1.442695
  %v1113 = vpow.pop %v1112
  %v1114 = vmul.f32 %v1111, 1.442695
  %v1115 = vpow.pop %v1114
  %v1116 = vsel %vm382, %v1113, 0.0
  %1117 = vadd.xlane.f32.xlu0 %v1116
  %v1118 = vpop.xlane.xlu0 %1117
  %v1119 = vsel %vm386, %v1115, 0.0
  %1120 = vadd.xlane.f32.xlu0 %v1119
  %v1121 = vpop.xlane.xlu0 %1120
  %v1122 = vrcp.pop %v1118
  %v1123 = vrcp.pop %v1121
  %v1124 = vmul.f32 %v1113, %v1122
  %v1125 = vmul.f32 %v1115, %v1123
  %v1126 = vpack.c.bf16 %v1125, %v1124
  %1127 = vrot.lane.b32.xlu0 %v1049, 64
  %v1128 = vpop.permute.xlu0 %1127
  %v1130 = vsel %vm382, %v1126, 0
  %v1133 = vsel %vm412, %v1128, 0
  %1135 = vmatprep.subr.bf16.mxu0 0
  %1136 = vmatpush1.bf16.msra.mxu0 %v1133
  %1137 = vmatprep.subr.bf16.mxu0 0
  %1138 = vmatpush1.bf16.msra.mxu0 0
  %1139 = vmatprep.subr.bf16.mxu0 0
  %1140 = vmatpush1.bf16.msra.mxu0 0
  %1141 = vmatprep.subr.bf16.mxu0 0
  %1142 = vmatpush1.bf16.msra.mxu0 0
  %1143 = vmatprep.subr.bf16.mxu0 0
  %1144 = vmatpush1.bf16.msra.mxu0 0
  %1145 = vmatprep.subr.bf16.mxu0 0
  %1146 = vmatpush1.bf16.msra.mxu0 0
  %1147 = vmatprep.subr.bf16.mxu0 0
  %1148 = vmatpush1.bf16.msra.mxu0 0
  %1149 = vmatprep.subr.bf16.mxu0 0
  %1150 = vmatpush1.bf16.msra.mxu0 0
  %1151 = vmatprep.subr.bf16.mxu0 0
  %1152 = vmatpush1.bf16.msra.mxu0 0
  %1153 = vmatprep.subr.bf16.mxu0 0
  %1154 = vmatpush1.bf16.msra.mxu0 0
  %1155 = vmatprep.subr.bf16.mxu0 0
  %1156 = vmatpush1.bf16.msra.mxu0 0
  %1157 = vmatprep.subr.bf16.mxu0 0
  %1158 = vmatpush1.bf16.msra.mxu0 0
  %1159 = vmatprep.subr.bf16.mxu0 0
  %1160 = vmatpush1.bf16.msra.mxu0 0
  %1161 = vmatprep.subr.bf16.mxu0 0
  %1162 = vmatpush1.bf16.msra.mxu0 0
  %1163 = vmatprep.subr.bf16.mxu0 0
  %1164 = vmatpush1.bf16.msra.mxu0 0
  %1165 = vmatprep.subr.bf16.mxu0 0
  %1166 = vmatpush1.bf16.msra.mxu0 0
  %1167 = vmatprep.mubr.bf16.mxu0 0
  %1168 = vmatmul.mubr.bf16.gmra.mrb[0].mxu0 %v1130
  %v1169 = vpop.f32.mrb[0].mxu0
  %v1170 = vadd.f32 0.0, %v1169
  %v1171 = vpop.f32.mrb[0].mxu0
  %v1172 = vpop.f32.mrb[0].mxu0
  %v1173 = vadd.f32 0.0, %v1172
  %v1174 = vpop.f32.mrb[0].mxu0
  %1175 = vdwg.mxu0
  %1176 = vrot.lane.b32.xlu0 %v1049, 112
  %v1177 = vpop.permute.xlu0 %1176
  %1178 = vrot.lane.b32.xlu0 %v1049, 80
  %v1179 = vpop.permute.xlu0 %1178
  %v1181 = vsel %vm330, %v1177, 0
  %v1184 = vsel %vm330, %v1179, 0
  %1186 = vmatprep.subr.bf16.mxu0 0
  %1187 = vmatpush1.bf16.xpose.msra.mxu0 %v1184
  %1188 = vmatprep.subr.bf16.mxu0 0
  %1189 = vmatpush1.bf16.xpose.msra.mxu0 0
  %1190 = vmatprep.subr.bf16.mxu0 0
  %1191 = vmatpush1.bf16.xpose.msra.mxu0 0
  %1192 = vmatprep.subr.bf16.mxu0 0
  %1193 = vmatpush1.bf16.xpose.msra.mxu0 0
  %1194 = vmatprep.subr.bf16.mxu0 0
  %1195 = vmatpush1.bf16.xpose.msra.mxu0 0
  %1196 = vmatprep.subr.bf16.mxu0 0
  %1197 = vmatpush1.bf16.xpose.msra.mxu0 0
  %1198 = vmatprep.subr.bf16.mxu0 0
  %1199 = vmatpush1.bf16.xpose.msra.mxu0 0
  %1200 = vmatprep.subr.bf16.mxu0 0
  %1201 = vmatpush1.bf16.xpose.msra.mxu0 0
  %1202 = vmatprep.subr.bf16.mxu0 0
  %1203 = vmatpush1.bf16.xpose.msra.mxu0 0
  %1204 = vmatprep.subr.bf16.mxu0 0
  %1205 = vmatpush1.bf16.xpose.msra.mxu0 0
  %1206 = vmatprep.subr.bf16.mxu0 0
  %1207 = vmatpush1.bf16.xpose.msra.mxu0 0
  %1208 = vmatprep.subr.bf16.mxu0 0
  %1209 = vmatpush1.bf16.xpose.msra.mxu0 0
  %1210 = vmatprep.subr.bf16.mxu0 0
  %1211 = vmatpush1.bf16.xpose.msra.mxu0 0
  %1212 = vmatprep.subr.bf16.mxu0 0
  %1213 = vmatpush1.bf16.xpose.msra.mxu0 0
  %1214 = vmatprep.subr.bf16.mxu0 0
  %1215 = vmatpush1.bf16.xpose.msra.mxu0 0
  %1216 = vmatprep.subr.bf16.mxu0 0
  %1217 = vmatpush1.bf16.xpose.msra.mxu0 0
  %1218 = vmatprep.mubr.bf16.mxu0 0
  %1219 = vmatmul.mubr.bf16.gmra.mrb[0].mxu0 %v1181
  %v1220 = vpop.f32.mrb[0].mxu0
  %v1221 = vadd.f32 0.0, %v1220
  %v1222 = vpop.f32.mrb[0].mxu0
  %v1223 = vpop.f32.mrb[0].mxu0
  %v1224 = vadd.f32 0.0, %v1223
  %v1225 = vpop.f32.mrb[0].mxu0
  %1226 = vdwg.mxu0
  %v1227 = vmul.f32 %v1221, 0.25
  %v1228 = vmul.f32 %v1224, 0.25
  %v1229 = vadd.f32 %v1227, %v216
  %v1230 = vadd.f32 %v1228, %v217
  %v1231 = vsel %vm382, %v1229, -inf
  %1232 = vmax.xlane.f32.xlu0 %v1231
  %v1233 = vpop.xlane.xlu0 %1232
  %v1234 = vsel %vm386, %v1230, -inf
  %1235 = vmax.xlane.f32.xlu0 %v1234
  %v1236 = vpop.xlane.xlu0 %1235
  %v1237 = vsub.f32 %v1229, %v1233
  %v1238 = vsub.f32 %v1230, %v1236
  %v1239 = vmul.f32 %v1237, 1.442695
  %v1240 = vpow.pop %v1239
  %v1241 = vmul.f32 %v1238, 1.442695
  %v1242 = vpow.pop %v1241
  %v1243 = vsel %vm382, %v1240, 0.0
  %1244 = vadd.xlane.f32.xlu0 %v1243
  %v1245 = vpop.xlane.xlu0 %1244
  %v1246 = vsel %vm386, %v1242, 0.0
  %1247 = vadd.xlane.f32.xlu0 %v1246
  %v1248 = vpop.xlane.xlu0 %1247
  %v1249 = vrcp.pop %v1245
  %v1250 = vrcp.pop %v1248
  %v1251 = vmul.f32 %v1240, %v1249
  %v1252 = vmul.f32 %v1242, %v1250
  %v1253 = vpack.c.bf16 %v1252, %v1251
  %1254 = vrot.lane.b32.xlu0 %v1049, 48
  %v1255 = vpop.permute.xlu0 %1254
  %v1257 = vsel %vm382, %v1253, 0
  %v1260 = vsel %vm412, %v1255, 0
  %1262 = vmatprep.subr.bf16.mxu0 0
  %1263 = vmatpush1.bf16.msra.mxu0 %v1260
  %1264 = vmatprep.subr.bf16.mxu0 0
  %1265 = vmatpush1.bf16.msra.mxu0 0
  %1266 = vmatprep.subr.bf16.mxu0 0
  %1267 = vmatpush1.bf16.msra.mxu0 0
  %1268 = vmatprep.subr.bf16.mxu0 0
  %1269 = vmatpush1.bf16.msra.mxu0 0
  %1270 = vmatprep.subr.bf16.mxu0 0
  %1271 = vmatpush1.bf16.msra.mxu0 0
  %1272 = vmatprep.subr.bf16.mxu0 0
  %1273 = vmatpush1.bf16.msra.mxu0 0
  %1274 = vmatprep.subr.bf16.mxu0 0
  %1275 = vmatpush1.bf16.msra.mxu0 0
  %1276 = vmatprep.subr.bf16.mxu0 0
  %1277 = vmatpush1.bf16.msra.mxu0 0
  %1278 = vmatprep.subr.bf16.mxu0 0
  %1279 = vmatpush1.bf16.msra.mxu0 0
  %1280 = vmatprep.subr.bf16.mxu0 0
  %1281 = vmatpush1.bf16.msra.mxu0 0
  %1282 = vmatprep.subr.bf16.mxu0 0
  %1283 = vmatpush1.bf16.msra.mxu0 0
  %1284 = vmatprep.subr.bf16.mxu0 0
  %1285 = vmatpush1.bf16.msra.mxu0 0
  %1286 = vmatprep.subr.bf16.mxu0 0
  %1287 = vmatpush1.bf16.msra.mxu0 0
  %1288 = vmatprep.subr.bf16.mxu0 0
  %1289 = vmatpush1.bf16.msra.mxu0 0
  %1290 = vmatprep.subr.bf16.mxu0 0
  %1291 = vmatpush1.bf16.msra.mxu0 0
  %1292 = vmatprep.subr.bf16.mxu0 0
  %1293 = vmatpush1.bf16.msra.mxu0 0
  %1294 = vmatprep.mubr.bf16.mxu0 0
  %1295 = vmatmul.mubr.bf16.gmra.mrb[0].mxu0 %v1257
  %v1296 = vpop.f32.mrb[0].mxu0
  %v1297 = vadd.f32 0.0, %v1296
  %v1298 = vpop.f32.mrb[0].mxu0
  %v1299 = vpop.f32.mrb[0].mxu0
  %v1300 = vadd.f32 0.0, %v1299
  %v1301 = vpop.f32.mrb[0].mxu0
  %1302 = vdwg.mxu0
  %1305 = vrot.lane.b32.xlu0 %v1297, 16
  %v1306 = vpop.permute.xlu0 %1305
  %1307 = vrot.lane.b32.xlu0 %v1300, 16
  %v1308 = vpop.permute.xlu0 %1307
  %v1311 = vsel %vm330, %v1170, %v1306
  %v1312 = vsel %vm330, %v1173, %v1308
  %v1313 = vpack.c.bf16 %v1312, %v1311
  %s1314 = scalar_lea.vmem %s6, 16
  %v1315 = vld [vmem:[%s1314] sm:$0xf]
  %v1316 = vld [vmem:[%s1314 + $0x4] sm:$0xf]
  %v1317 = vld [vmem:[%s1314 + $0x8] sm:$0xf]
  %v1318 = vld [vmem:[%s1314 + $0xc] sm:$0xf]
  %v1319 = vlaneseq
  %v1320 = vshrl.u32 %v1319, 7
  %v1321 = vsub.s32 3, %v1320
  %v1322 = vrot.slane %v943, %v1321
  %v1327 = vunpack.c.l.b16 %v1315
  %v1328 = vunpack.c.l.b16 %v1316
  %v1329 = vunpack.c.l.b16 %v1317
  %v1330 = vunpack.c.l.b16 %v1318
  %v1331 = vpack.c.b16 %v1328, %v1327
  %v1332 = vpack.c.b16 %v1330, %v1329
  %v1336 = vsel %vm220, %v1313, 0
  %1338 = vmatprep.subr.bf16.mxu0 0
  %1339 = vmatpush1.bf16.msra.mxu0 %v1331
  %1340 = vmatprep.subr.bf16.mxu0 0
  %1341 = vmatpush1.bf16.msra.mxu0 %v1332
  %1342 = vmatprep.subr.bf16.mxu0 0
  %1343 = vmatpush1.bf16.msra.mxu0 0
  %1344 = vmatprep.subr.bf16.mxu0 0
  %1345 = vmatpush1.bf16.msra.mxu0 0
  %1346 = vmatprep.subr.bf16.mxu0 0
  %1347 = vmatpush1.bf16.msra.mxu0 0
  %1348 = vmatprep.subr.bf16.mxu0 0
  %1349 = vmatpush1.bf16.msra.mxu0 0
  %1350 = vmatprep.subr.bf16.mxu0 0
  %1351 = vmatpush1.bf16.msra.mxu0 0
  %1352 = vmatprep.subr.bf16.mxu0 0
  %1353 = vmatpush1.bf16.msra.mxu0 0
  %1354 = vmatprep.subr.bf16.mxu0 0
  %1355 = vmatpush1.bf16.msra.mxu0 0
  %1356 = vmatprep.subr.bf16.mxu0 0
  %1357 = vmatpush1.bf16.msra.mxu0 0
  %1358 = vmatprep.subr.bf16.mxu0 0
  %1359 = vmatpush1.bf16.msra.mxu0 0
  %1360 = vmatprep.subr.bf16.mxu0 0
  %1361 = vmatpush1.bf16.msra.mxu0 0
  %1362 = vmatprep.subr.bf16.mxu0 0
  %1363 = vmatpush1.bf16.msra.mxu0 0
  %1364 = vmatprep.subr.bf16.mxu0 0
  %1365 = vmatpush1.bf16.msra.mxu0 0
  %1366 = vmatprep.subr.bf16.mxu0 0
  %1367 = vmatpush1.bf16.msra.mxu0 0
  %1368 = vmatprep.subr.bf16.mxu0 0
  %1369 = vmatpush1.bf16.msra.mxu0 0
  %1370 = vmatprep.mubr.bf16.mxu0 0
  %1371 = vmatmul.mubr.bf16.gmra.mrb[0].mxu0 %v1336
  %v1372 = vpop.f32.mrb[0].mxu0
  %v1373 = vadd.f32 %v1322, %v1372
  %v1374 = vpop.f32.mrb[0].mxu0
  %v1375 = vpop.f32.mrb[0].mxu0
  %v1376 = vadd.f32 %v1322, %v1375
  %v1377 = vpop.f32.mrb[0].mxu0
  %1378 = vdwg.mxu0
  %v1379 = vlaneseq
  %v1380 = vshrl.u32 %v1379, 7
  %v1381 = vsub.s32 4, %v1380
  %v1382 = vrot.slane %v943, %v1381
  %v1383 = vmul.f32 %v1382, %v1373
  %v1384 = vmul.f32 %v1382, %v1376
  %v1385 = vadd.f32 %v940, %v1383
  %v1386 = vadd.f32 %v941, %v1384
  %v1387 = vsel %vm220, %v1385, 0.0
  %1388 = vadd.xlane.f32.xlu0 %v1387
  %v1389 = vpop.xlane.xlu0 %1388
  %v1390 = vsel %vm224, %v1386, 0.0
  %1391 = vadd.xlane.f32.xlu0 %v1390
  %v1392 = vpop.xlane.xlu0 %1391
  %v1393 = vmul.f32 %v1389, %v228
  %v1394 = vmul.f32 %v1392, %v228
  %v1395 = vsub.f32 %v1385, %v1393
  %v1396 = vsub.f32 %v1386, %v1394
  %v1397 = vmul.f32 %v1395, %v1395
  %v1398 = vmul.f32 %v1396, %v1396
  %v1399 = vsel %vm220, %v1397, 0.0
  %1400 = vadd.xlane.f32.xlu0 %v1399
  %v1401 = vpop.xlane.xlu0 %1400
  %v1402 = vsel %vm224, %v1398, 0.0
  %1403 = vadd.xlane.f32.xlu0 %v1402
  %v1404 = vpop.xlane.xlu0 %1403
  %v1405 = vmul.f32 %v1401, %v228
  %v1406 = vmul.f32 %v1404, %v228
  %v1407 = vadd.f32 %v1405, 1e-06
  %v1408 = vadd.f32 %v1406, 1e-06
  %v1409 = vrsqrt.pop %v1407
  %v1410 = vrsqrt.pop %v1408
  %v1411 = vmul.f32 %v1395, %v1409
  %v1412 = vmul.f32 %v1396, %v1410
  %v1413 = vlaneseq
  %v1414 = vshrl.u32 %v1413, 7
  %v1415 = vsub.s32 5, %v1414
  %v1416 = vrot.slane %v943, %v1415
  %v1417 = vmul.f32 %v1411, %v1416
  %v1418 = vmul.f32 %v1412, %v1416
  %v1419 = vlaneseq
  %v1420 = vshrl.u32 %v1419, 7
  %v1421 = vsub.s32 6, %v1420
  %v1422 = vrot.slane %v943, %v1421
  %v1423 = vadd.f32 %v1417, %v1422
  %v1424 = vadd.f32 %v1418, %v1422
  %v1425 = vpack.c.bf16 %v1424, %v1423
  %s1426 = scalar_lea.vmem %s7, 16
  %v1427 = vld [vmem:[%s1426] sm:$0xf]
  %v1428 = vld [vmem:[%s1426 + $0x4] sm:$0xf]
  %v1429 = vld [vmem:[%s1426 + $0x8] sm:$0xf]
  %v1430 = vld [vmem:[%s1426 + $0xc] sm:$0xf]
  %v1431 = vlaneseq
  %v1432 = vshrl.u32 %v1431, 7
  %v1433 = vsub.s32 7, %v1432
  %v1434 = vrot.slane %v943, %v1433
  %v1439 = vunpack.c.l.b16 %v1427
  %v1440 = vunpack.c.l.b16 %v1428
  %v1441 = vunpack.c.l.b16 %v1429
  %v1442 = vunpack.c.l.b16 %v1430
  %v1443 = vpack.c.b16 %v1440, %v1439
  %v1444 = vpack.c.b16 %v1442, %v1441
  %v1448 = vsel %vm220, %v1425, 0
  %1450 = vmatprep.subr.bf16.mxu0 0
  %1451 = vmatpush1.bf16.msra.mxu0 %v1443
  %1452 = vmatprep.subr.bf16.mxu0 0
  %1453 = vmatpush1.bf16.msra.mxu0 %v1444
  %1454 = vmatprep.subr.bf16.mxu0 0
  %1455 = vmatpush1.bf16.msra.mxu0 0
  %1456 = vmatprep.subr.bf16.mxu0 0
  %1457 = vmatpush1.bf16.msra.mxu0 0
  %1458 = vmatprep.subr.bf16.mxu0 0
  %1459 = vmatpush1.bf16.msra.mxu0 0
  %1460 = vmatprep.subr.bf16.mxu0 0
  %1461 = vmatpush1.bf16.msra.mxu0 0
  %1462 = vmatprep.subr.bf16.mxu0 0
  %1463 = vmatpush1.bf16.msra.mxu0 0
  %1464 = vmatprep.subr.bf16.mxu0 0
  %1465 = vmatpush1.bf16.msra.mxu0 0
  %1466 = vmatprep.subr.bf16.mxu0 0
  %1467 = vmatpush1.bf16.msra.mxu0 0
  %1468 = vmatprep.subr.bf16.mxu0 0
  %1469 = vmatpush1.bf16.msra.mxu0 0
  %1470 = vmatprep.subr.bf16.mxu0 0
  %1471 = vmatpush1.bf16.msra.mxu0 0
  %1472 = vmatprep.subr.bf16.mxu0 0
  %1473 = vmatpush1.bf16.msra.mxu0 0
  %1474 = vmatprep.subr.bf16.mxu0 0
  %1475 = vmatpush1.bf16.msra.mxu0 0
  %1476 = vmatprep.subr.bf16.mxu0 0
  %1477 = vmatpush1.bf16.msra.mxu0 0
  %1478 = vmatprep.subr.bf16.mxu0 0
  %1479 = vmatpush1.bf16.msra.mxu0 0
  %1480 = vmatprep.subr.bf16.mxu0 0
  %1481 = vmatpush1.bf16.msra.mxu0 0
  %1482 = vmatprep.mubr.bf16.mxu0 0
  %1483 = vmatmul.mubr.bf16.gmra.mrb[0].mxu0 %v1448
  %v1484 = vpop.f32.mrb[0].mxu0
  %v1485 = vadd.f32 %v1434, %v1484
  %v1486 = vpop.f32.mrb[0].mxu0
  %v1487 = vpop.f32.mrb[0].mxu0
  %v1488 = vadd.f32 %v1434, %v1487
  %v1489 = vpop.f32.mrb[0].mxu0
  %1490 = vdwg.mxu0
  %v1491 = vmul.f32 %v1485, 0.5
  %v1492 = vmul.f32 %v1488, 0.5
  %v1493 = vmul.f32 %v1485, 0.70710677
  %v1494 = vmul.f32 %v1488, 0.70710677
  %v1495 = vand.u32 2147483647, %v1493
  %v1496 = vand.u32 2147483647, %v1494
  %v1497 = vmul.f32 %v1495, 0.3275911
  %v1498 = vmul.f32 %v1496, 0.3275911
  %v1499 = vadd.f32 %v1497, 1.0
  %v1500 = vadd.f32 %v1498, 1.0
  %v1501 = vrcp.pop %v1499
  %v1502 = vmul.f32 1.0, %v1501
  %v1503 = vrcp.pop %v1500
  %v1504 = vmul.f32 1.0, %v1503
  %v1505 = vmul.f32 %v1502, 1.0614054
  %v1506 = vmul.f32 %v1504, 1.0614054
  %v1507 = vadd.f32 %v1505, -1.4531521
  %v1508 = vadd.f32 %v1506, -1.4531521
  %v1509 = vmul.f32 %v1507, %v1502
  %v1510 = vmul.f32 %v1508, %v1504
  %v1511 = vadd.f32 %v1509, 1.4214138
  %v1512 = vadd.f32 %v1510, 1.4214138
  %v1513 = vmul.f32 %v1511, %v1502
  %v1514 = vmul.f32 %v1512, %v1504
  %v1515 = vadd.f32 %v1513, -0.28449672
  %v1516 = vadd.f32 %v1514, -0.28449672
  %v1517 = vmul.f32 %v1515, %v1502
  %v1518 = vmul.f32 %v1516, %v1504
  %v1519 = vadd.f32 %v1517, 0.2548296
  %v1520 = vadd.f32 %v1518, 0.2548296
  %v1521 = vmul.f32 %v1519, %v1502
  %v1522 = vmul.f32 %v1520, %v1504
  %v1523 = vmul.f32 %v1493, %v1493
  %v1524 = vmul.f32 %v1494, %v1494
  %v1525 = vsub.f32 0.0, %v1523
  %v1526 = vsub.f32 0.0, %v1524
  %v1527 = vmul.f32 %v1525, 1.442695
  %v1528 = vpow.pop %v1527
  %v1529 = vmul.f32 %v1526, 1.442695
  %v1530 = vpow.pop %v1529
  %v1531 = vmul.f32 %v1521, %v1528
  %v1532 = vmul.f32 %v1522, %v1530
  %v1533 = vsub.f32 1.0, %v1531
  %v1534 = vsub.f32 1.0, %v1532
  %vm1535 = vcmp.ge.f32.partialorder %v1493, 0.0
  %vm1536 = vcmp.ge.f32.partialorder %v1494, 0.0
  %v1537 = vsub.f32 0.0, %v1533
  %v1538 = vsub.f32 0.0, %v1534
  %v1539 = vsel %vm1535, %v1533, %v1537
  %v1540 = vsel %vm1536, %v1534, %v1538
  %v1541 = vadd.f32 %v1539, 1.0
  %v1542 = vadd.f32 %v1540, 1.0
  %v1543 = vmul.f32 %v1491, %v1541
  %v1544 = vmul.f32 %v1492, %v1542
  %v1545 = vpack.c.bf16 %v1544, %v1543
  %s1546 = scalar_lea.vmem %s8, 64
  %v1547 = vld [vmem:[%s1546] sm:$0xf]
  %v1548 = vld [vmem:[%s1546 + $0x4] sm:$0xf]
  %v1549 = vld [vmem:[%s1546 + $0x8] sm:$0xf]
  %v1550 = vld [vmem:[%s1546 + $0xc] sm:$0xf]
  %v1551 = vld [vmem:[%s1546 + $0x10] sm:$0xf]
  %v1552 = vld [vmem:[%s1546 + $0x14] sm:$0xf]
  %v1553 = vld [vmem:[%s1546 + $0x18] sm:$0xf]
  %v1554 = vld [vmem:[%s1546 + $0x1c] sm:$0xf]
  %v1555 = vld [vmem:[%s1546 + $0x20] sm:$0xf]
  %v1556 = vld [vmem:[%s1546 + $0x24] sm:$0xf]
  %v1557 = vld [vmem:[%s1546 + $0x28] sm:$0xf]
  %v1558 = vld [vmem:[%s1546 + $0x2c] sm:$0xf]
  %v1559 = vld [vmem:[%s1546 + $0x30] sm:$0xf]
  %v1560 = vld [vmem:[%s1546 + $0x34] sm:$0xf]
  %v1561 = vld [vmem:[%s1546 + $0x38] sm:$0xf]
  %v1562 = vld [vmem:[%s1546 + $0x3c] sm:$0xf]
  %v1563 = vlaneseq
  %v1564 = vshrl.u32 %v1563, 7
  %v1565 = vsub.s32 0, %v1564
  %v1566 = vrot.slane %v944, %v1565
  %v1583 = vunpack.c.l.b16 %v1547
  %v1584 = vunpack.c.l.b16 %v1548
  %v1585 = vunpack.c.l.b16 %v1549
  %v1586 = vunpack.c.l.b16 %v1550
  %v1587 = vunpack.c.l.b16 %v1551
  %v1588 = vunpack.c.l.b16 %v1552
  %v1589 = vunpack.c.l.b16 %v1553
  %v1590 = vunpack.c.l.b16 %v1554
  %v1591 = vunpack.c.l.b16 %v1555
  %v1592 = vunpack.c.l.b16 %v1556
  %v1593 = vunpack.c.l.b16 %v1557
  %v1594 = vunpack.c.l.b16 %v1558
  %v1595 = vunpack.c.l.b16 %v1559
  %v1596 = vunpack.c.l.b16 %v1560
  %v1597 = vunpack.c.l.b16 %v1561
  %v1598 = vunpack.c.l.b16 %v1562
  %v1599 = vpack.c.b16 %v1584, %v1583
  %v1600 = vpack.c.b16 %v1586, %v1585
  %v1601 = vpack.c.b16 %v1588, %v1587
  %v1602 = vpack.c.b16 %v1590, %v1589
  %v1603 = vpack.c.b16 %v1592, %v1591
  %v1604 = vpack.c.b16 %v1594, %v1593
  %v1605 = vpack.c.b16 %v1596, %v1595
  %v1606 = vpack.c.b16 %v1598, %v1597
  %1615 = vmatprep.subr.bf16.mxu0 0
  %1616 = vmatpush1.bf16.msra.mxu0 %v1599
  %1617 = vmatprep.subr.bf16.mxu0 0
  %1618 = vmatpush1.bf16.msra.mxu0 %v1600
  %1619 = vmatprep.subr.bf16.mxu0 0
  %1620 = vmatpush1.bf16.msra.mxu0 %v1601
  %1621 = vmatprep.subr.bf16.mxu0 0
  %1622 = vmatpush1.bf16.msra.mxu0 %v1602
  %1623 = vmatprep.subr.bf16.mxu0 0
  %1624 = vmatpush1.bf16.msra.mxu0 %v1603
  %1625 = vmatprep.subr.bf16.mxu0 0
  %1626 = vmatpush1.bf16.msra.mxu0 %v1604
  %1627 = vmatprep.subr.bf16.mxu0 0
  %1628 = vmatpush1.bf16.msra.mxu0 %v1605
  %1629 = vmatprep.subr.bf16.mxu0 0
  %1630 = vmatpush1.bf16.msra.mxu0 %v1606
  %1631 = vmatprep.subr.bf16.mxu0 0
  %1632 = vmatpush1.bf16.msra.mxu0 0
  %1633 = vmatprep.subr.bf16.mxu0 0
  %1634 = vmatpush1.bf16.msra.mxu0 0
  %1635 = vmatprep.subr.bf16.mxu0 0
  %1636 = vmatpush1.bf16.msra.mxu0 0
  %1637 = vmatprep.subr.bf16.mxu0 0
  %1638 = vmatpush1.bf16.msra.mxu0 0
  %1639 = vmatprep.subr.bf16.mxu0 0
  %1640 = vmatpush1.bf16.msra.mxu0 0
  %1641 = vmatprep.subr.bf16.mxu0 0
  %1642 = vmatpush1.bf16.msra.mxu0 0
  %1643 = vmatprep.subr.bf16.mxu0 0
  %1644 = vmatpush1.bf16.msra.mxu0 0
  %1645 = vmatprep.subr.bf16.mxu0 0
  %1646 = vmatpush1.bf16.msra.mxu0 0
  %1647 = vmatprep.mubr.bf16.mxu0 0
  %1648 = vmatmul.mubr.bf16.gmra.mrb[0].mxu0 %v1545
  %v1649 = vpop.f32.mrb[0].mxu0
  %v1650 = vadd.f32 %v1566, %v1649
  %v1651 = vpop.f32.mrb[0].mxu0
  %v1652 = vpop.f32.mrb[0].mxu0
  %v1653 = vadd.f32 %v1566, %v1652
  %v1654 = vpop.f32.mrb[0].mxu0
  %1655 = vdwg.mxu0
  %v1656 = vlaneseq
  %v1657 = vshrl.u32 %v1656, 7
  %v1658 = vsub.s32 1, %v1657
  %v1659 = vrot.slane %v944, %v1658
  %v1660 = vmul.f32 %v1659, %v1650
  %v1661 = vmul.f32 %v1659, %v1653
  %v1662 = vadd.f32 %v1385, %v1660
  %v1663 = vadd.f32 %v1386, %v1661
  %v1664 = vld [vmem:[%s2] sm:$0xff]
  %v1666 = vsel %vm382, %v1664, 0
  %vm1668 = vcmask 1041408
  %v1670 = vsel %vm1668, %v1663, 0
  %1672 = vmatprep.subr.mxu0 0.0
  %1673 = vmatpush1.msra.mxu0 %v1662
  %1674 = vmatprep.subr.mxu0 0.0
  %1675 = vmatpush1.msra.mxu0 %v1670
  %1676 = vmatprep.subr.mxu0 0.0
  %1677 = vmatpush1.msra.mxu0 0.0
  %1678 = vmatprep.subr.mxu0 0.0
  %1679 = vmatpush1.msra.mxu0 0.0
  %1680 = vmatprep.subr.mxu0 0.0
  %1681 = vmatpush1.msra.mxu0 0.0
  %1682 = vmatprep.subr.mxu0 0.0
  %1683 = vmatpush1.msra.mxu0 0.0
  %1684 = vmatprep.subr.mxu0 0.0
  %1685 = vmatpush1.msra.mxu0 0.0
  %1686 = vmatprep.subr.mxu0 0.0
  %1687 = vmatpush1.msra.mxu0 0.0
  %1688 = vmatprep.subr.mxu0 0.0
  %1689 = vmatpush1.msra.mxu0 0.0
  %1690 = vmatprep.subr.mxu0 0.0
  %1691 = vmatpush1.msra.mxu0 0.0
  %1692 = vmatprep.subr.mxu0 0.0
  %1693 = vmatpush1.msra.mxu0 0.0
  %1694 = vmatprep.subr.mxu0 0.0
  %1695 = vmatpush1.msra.mxu0 0.0
  %1696 = vmatprep.subr.mxu0 0.0
  %1697 = vmatpush1.msra.mxu0 0.0
  %1698 = vmatprep.subr.mxu0 0.0
  %1699 = vmatpush1.msra.mxu0 0.0
  %1700 = vmatprep.subr.mxu0 0.0
  %1701 = vmatpush1.msra.mxu0 0.0
  %1702 = vmatprep.subr.mxu0 0.0
  %1703 = vmatpush1.msra.mxu0 0.0
  %1704 = vmatprep.subr.mxu0 0.0
  %1705 = vmatpush1.msra.mxu0 0.0
  %1706 = vmatprep.subr.mxu0 0.0
  %1707 = vmatpush1.msra.mxu0 0.0
  %1708 = vmatprep.subr.mxu0 0.0
  %1709 = vmatpush1.msra.mxu0 0.0
  %1710 = vmatprep.subr.mxu0 0.0
  %1711 = vmatpush1.msra.mxu0 0.0
  %1712 = vmatprep.subr.mxu0 0.0
  %1713 = vmatpush1.msra.mxu0 0.0
  %1714 = vmatprep.subr.mxu0 0.0
  %1715 = vmatpush1.msra.mxu0 0.0
  %1716 = vmatprep.subr.mxu0 0.0
  %1717 = vmatpush1.msra.mxu0 0.0
  %1718 = vmatprep.subr.mxu0 0.0
  %1719 = vmatpush1.msra.mxu0 0.0
  %1720 = vmatprep.subr.mxu0 0.0
  %1721 = vmatpush1.msra.mxu0 0.0
  %1722 = vmatprep.subr.mxu0 0.0
  %1723 = vmatpush1.msra.mxu0 0.0
  %1724 = vmatprep.subr.mxu0 0.0
  %1725 = vmatpush1.msra.mxu0 0.0
  %1726 = vmatprep.subr.mxu0 0.0
  %1727 = vmatpush1.msra.mxu0 0.0
  %1728 = vmatprep.subr.mxu0 0.0
  %1729 = vmatpush1.msra.mxu0 0.0
  %1730 = vmatprep.subr.mxu0 0.0
  %1731 = vmatpush1.msra.mxu0 0.0
  %1732 = vmatprep.subr.mxu0 0.0
  %1733 = vmatpush1.msra.mxu0 0.0
  %1734 = vmatprep.subr.mxu0 0.0
  %1735 = vmatpush1.msra.mxu0 0.0
  %1736 = vmatprep.mubr.f32.mxu0 0.0
  %1737 = vmatmul.mubr.f32.gmra.mrb[0].mxu0 %v1666
  %v1738 = vpop.f32.mrb[0].mxu0
  %v1739 = vadd.f32 0.0, %v1738
  %v1740 = vpop.f32.mrb[0].mxu0
  %1741 = vdwg.mxu0
  %v1742 = vld [vmem:[%s10] sm:$0x1]
  %v1743 = vld [vmem:[%s10 + $0x1] sm:$0x1]
  %v1744 = vsel %vm220, %v1739, 0.0
  %1745 = vadd.xlane.f32.xlu0 %v1744
  %v1746 = vpop.xlane.xlu0 %1745
  %v1747 = vmul.f32 %v1746, %v228
  %v1748 = vsub.f32 %v1739, %v1747
  %v1749 = vmul.f32 %v1748, %v1748
  %v1750 = vsel %vm220, %v1749, 0.0
  %1751 = vadd.xlane.f32.xlu0 %v1750
  %v1752 = vpop.xlane.xlu0 %1751
  %v1753 = vmul.f32 %v1752, %v228
  %v1754 = vadd.f32 %v1753, 1e-06
  %v1755 = vrsqrt.pop %v1754
  %v1756 = vmul.f32 %v1748, %v1755
  %v1757 = vlaneseq
  %v1758 = vshrl.u32 %v1757, 7
  %v1759 = vsub.s32 0, %v1758
  %v1760 = vrot.slane %v1742, %v1759
  %v1761 = vmul.f32 %v1756, %v1760
  %v1762 = vlaneseq
  %v1763 = vshrl.u32 %v1762, 7
  %v1764 = vsub.s32 0, %v1763
  %v1765 = vrot.slane %v1743, %v1764
  %v1766 = vadd.f32 %v1761, %v1765
  %v1767 = vsel %vm220, %v1766, 0.0
  %1768 = vst [vmem:[%s11] sm:$0xff] %v1767
  // Predicated region
  $region46: #{frozen_vision_encoder.1} parent=0 // pred_check
    _
  $region47: #{frozen_vision_encoder.1} parent=0 // pred_check_branch
    %1770 = sbr.rel (0) target = $region49
  $region48: #{frozen_vision_encoder.1} parent=0 // pred_region
    _
  $region49: #{frozen_vision_encoder.1} parent=0 // pred_fallthru
    _
  // Predicated region
  $region50: #{frozen_vision_encoder.1} parent=0 // pred_check
    _
  $region51: #{frozen_vision_encoder.1} parent=0 // pred_check_branch
    %1772 = sbr.rel (0) target = $region53
  $region52: #{frozen_vision_encoder.1} parent=0 // pred_region
    _
  $region53: #{frozen_vision_encoder.1} parent=0 // pred_fallthru
    _

</llo_original>
